<compile_context>
chip_gen: v7x
topology: tpu7x:2x2x1
jax: 0.10.0
libtpu: 0.0.40
codegen_flags: <defaults>
</compile_context>

<pallas_src>
import functools

import jax
import jax.numpy as jnp
from jax.experimental import pallas as pl
from jax.experimental.pallas import tpu as pltpu

N_HIDDEN = 256          # fixed by TrunkModel.__init__
N_RESIDUAL = 3          # number of ResidualFC blocks
P = 16                  # 'p' constructor arg -> output dim = 2*p = 32
OUT_DIM = 2 * P
MAX_TILE_N = 128        # rows of x processed per grid step (fp32 activations)
LANE = 128              # lane width for a dense output store


def _round_up(a: int, b: int) -> int:
    return ((a + b - 1) // b) * b


def _trunk_kernel(n_residual,
                  x_ref, w_in_ref, b_in_ref,
                  rw1_ref, rb1_ref, rw2_ref, rb2_ref,
                  w_out_ref, b_out_ref,
                  o_ref):
    # ---- input linear (K=2) on the VPU: outer-product FMA + tanh (fp32) ----
    x = x_ref[...]                       # (tile_n, 2) f32
    w_in = w_in_ref[...]                 # (2, 256)    f32
    h = jnp.tanh(x[:, 0:1] * w_in[0:1, :]
                 + x[:, 1:2] * w_in[1:2, :]
                 + b_in_ref[...])        # (tile_n, 256) f32

    # ---- ResidualFC blocks: bf16 operands, fp32 accumulation on the MXU ----
    for i in range(n_residual):          # n_residual is static -> unrolled
        t = jnp.tanh(
            jnp.dot(h.astype(jnp.bfloat16), rw1_ref[i],
                    preferred_element_type=jnp.float32)
            + rb1_ref[i])
        h = (jnp.dot(t.astype(jnp.bfloat16), rw2_ref[i],
                     preferred_element_type=jnp.float32)
             + rb2_ref[i]
             + h)

    # ---- output linear, lane-dense (padded to 128 output columns) ----
    o_ref[...] = (
        jnp.dot(h.astype(jnp.bfloat16), w_out_ref[...],
                preferred_element_type=jnp.float32)
        + b_out_ref[...]
    ).astype(o_ref.dtype)


def trunk_forward(x, params, *, max_tile_n=MAX_TILE_N):
    """Pallas TPU forward pass of TrunkModel.

    x: (Nc, 2) float32
    params: dict with w_in (2,256), b_in (1,256),
            rw1/rw2 (n_res,256,256), rb1/rb2 (n_res,1,256),
            w_out (256, 2p), b_out (1, 2p)   -- all float32
    """
    nc = x.shape[0]
    n_res = params["rw1"].shape[0]
    n_hidden = params["rw1"].shape[-1]
    out_dim = params["w_out"].shape[1]
    out_pad = _round_up(out_dim, LANE)          # lane-dense output columns

    # --- pick the row tile ---------------------------------------------------
    #  * <=16 rows: one small tile
    #  * small/medium Nc: split into two "parallel" steps (v7x has 2 TCs)
    #  * large Nc: cap at max_tile_n (keeps h/t vreg pressure sane for fp32)
    if nc <= 16:
        tile_n = _round_up(max(nc, 8), 8)
    elif nc <= 2 * max_tile_n:
        tile_n = _round_up(pl.cdiv(nc, 2), 8)
    else:
        tile_n = max_tile_n
    num_tiles = pl.cdiv(nc, tile_n)
    nc_pad = num_tiles * tile_n

    # --- wrapper-side padding / dtype prep -----------------------------------
    if nc_pad != nc:
        x = jnp.pad(x, ((0, nc_pad - nc), (0, 0)))
    bf16 = jnp.bfloat16
    rw1 = params["rw1"].astype(bf16)
    rw2 = params["rw2"].astype(bf16)
    w_out = jnp.pad(params["w_out"],
                    ((0, 0), (0, out_pad - out_dim))).astype(bf16)
    b_out = jnp.pad(params["b_out"], ((0, 0), (0, out_pad - out_dim)))
    w_in = params["w_in"]                      # stays fp32 (VPU path)
    b_in = params["b_in"]
    rb1 = params["rb1"]
    rb2 = params["rb2"]

    full = lambda shape: pl.BlockSpec(shape, lambda i: tuple(0 for _ in shape))

    out = pl.pallas_call(
        functools.partial(_trunk_kernel, n_res),
        out_shape=jax.ShapeDtypeStruct((nc_pad, out_pad), jnp.float32),
        grid_spec=pltpu.PrefetchScalarGridSpec(
            num_scalar_prefetch=0,
            grid=(num_tiles,),
            in_specs=[
                pl.BlockSpec((tile_n, x.shape[1]), lambda i: (i, 0)),  # x tile
                full(w_in.shape),
                full(b_in.shape),
                full(rw1.shape),
                full(rb1.shape),
                full(rw2.shape),
                full(rb2.shape),
                full(w_out.shape),
                full(b_out.shape),
            ],
            out_specs=pl.BlockSpec((tile_n, out_pad), lambda i: (i, 0)),
        ),
        compiler_params=pltpu.CompilerParams(
            dimension_semantics=("parallel",),
        ),
    )(x, w_in, b_in, rw1, rb1, rw2, rb2, w_out, b_out)

    return out[:nc, :out_dim]


def trunk_forward_ref(x, params):
    """Pure-JAX reference matching the kernel's bf16-matmul/fp32-accumulate math."""
    bf16 = jnp.bfloat16
    h = jnp.tanh(x @ params["w_in"] + params["b_in"])
    for i in range(params["rw1"].shape[0]):
        t = jnp.tanh(
            jnp.dot(h.astype(bf16), params["rw1"][i].astype(bf16),
                    preferred_element_type=jnp.float32) + params["rb1"][i])
        h = (jnp.dot(t.astype(bf16), params["rw2"][i].astype(bf16),
                     preferred_element_type=jnp.float32)
             + params["rb2"][i] + h)
    return (jnp.dot(h.astype(bf16), params["w_out"].astype(bf16),
                    preferred_element_type=jnp.float32) + params["b_out"])


def trunk_forward_ref_fp32(x, params):
    """Pure fp32 reference of TrunkModel.forward (looser comparison)."""
    h = jnp.tanh(x @ params["w_in"] + params["b_in"])
    for i in range(params["rw1"].shape[0]):
        t = jnp.tanh(h @ params["rw1"][i] + params["rb1"][i])
        h = t @ params["rw2"][i] + params["rb2"][i] + h
    return h @ params["w_out"] + params["b_out"]


def init_params(key, n_residual=N_RESIDUAL, p=P, n_hidden=N_HIDDEN):
    ks = jax.random.split(key, 8)
    scale = 0.1
    return {
        "w_in": scale * jax.random.normal(ks[0], (2, n_hidden), jnp.float32),
        "b_in": scale * jax.random.normal(ks[1], (1, n_hidden), jnp.float32),
        "rw1": scale * jax.random.normal(ks[2], (n_residual, n_hidden, n_hidden), jnp.float32),
        "rb1": scale * jax.random.normal(ks[3], (n_residual, 1, n_hidden), jnp.float32),
        "rw2": scale * jax.random.normal(ks[4], (n_residual, n_hidden, n_hidden), jnp.float32),
        "rb2": scale * jax.random.normal(ks[5], (n_residual, 1, n_hidden), jnp.float32),
        "w_out": scale * jax.random.normal(ks[6], (n_hidden, 2 * p), jnp.float32),
        "b_out": scale * jax.random.normal(ks[7], (1, 2 * p), jnp.float32),
    }


if __name__ == "__main__":
    key = jax.random.PRNGKey(0)
    k_x, k_p = jax.random.split(key)
    params = init_params(k_p)

    # Case 1: Nc multiple of 8 -> split into two parallel row tiles.
    Nc = 64
    x = jax.random.normal(k_x, (Nc, 2), jnp.float32)
    out = jax.block_until_ready(trunk_forward(x, params))
    ref = trunk_forward_ref(x, params)
    ref32 = trunk_forward_ref_fp32(x, params)
    assert out.shape == (Nc, OUT_DIM), out.shape
    assert jnp.allclose(out, ref, atol=2e-2, rtol=2e-2), "mismatch vs bf16 reference"
    assert jnp.allclose(out, ref32, atol=1e-1, rtol=1e-1), "mismatch vs fp32 reference"

    # Case 2: ragged Nc -> exercises wrapper-side row padding.
    Nc2 = 50
    x2 = jax.random.normal(k_x, (Nc2, 2), jnp.float32)
    out2 = jax.block_until_ready(trunk_forward(x2, params))
    ref2 = trunk_forward_ref(x2, params)
    assert out2.shape == (Nc2, OUT_DIM), out2.shape
    assert jnp.allclose(out2, ref2, atol=2e-2, rtol=2e-2), "mismatch vs reference (ragged Nc)"

    print("KERNEL_OK")
</pallas_src>

<mosaic_0001>
module attributes {stable_mosaic.version = 11 : i64} {
  func.func @_trunk_kernel(%arg0: i32, %arg1: memref<32x2xf32, #tpu.memory_space<vmem>>, %arg2: memref<2x256xf32, #tpu.memory_space<vmem>>, %arg3: memref<1x256xf32, #tpu.memory_space<vmem>>, %arg4: memref<3x256x256xbf16, #tpu.memory_space<vmem>>, %arg5: memref<3x1x256xf32, #tpu.memory_space<vmem>>, %arg6: memref<3x256x256xbf16, #tpu.memory_space<vmem>>, %arg7: memref<3x1x256xf32, #tpu.memory_space<vmem>>, %arg8: memref<256x128xbf16, #tpu.memory_space<vmem>>, %arg9: memref<1x128xf32, #tpu.memory_space<vmem>>, %arg10: memref<32x128xf32, #tpu.memory_space<vmem>>) attributes {dimension_semantics = [#tpu.dimension_semantics<parallel>], iteration_bounds = array<i64: 2>, scalar_prefetch = 0 : i64, scratch_operands = 0 : i64, tpu.core_type = #tpu.core_type<tc>, window_params = [{transform_indices = @transform_0, window_bounds = array<i64: 32, 2>}, {pipeline_mode = #tpu.pipeline_mode<synchronous>, transform_indices = @transform_1, window_bounds = array<i64: 2, 256>}, {pipeline_mode = #tpu.pipeline_mode<synchronous>, transform_indices = @transform_2, window_bounds = array<i64: 1, 256>}, {pipeline_mode = #tpu.pipeline_mode<synchronous>, transform_indices = @transform_3, window_bounds = array<i64: 3, 256, 256>}, {pipeline_mode = #tpu.pipeline_mode<synchronous>, transform_indices = @transform_4, window_bounds = array<i64: 3, 1, 256>}, {pipeline_mode = #tpu.pipeline_mode<synchronous>, transform_indices = @transform_5, window_bounds = array<i64: 3, 256, 256>}, {pipeline_mode = #tpu.pipeline_mode<synchronous>, transform_indices = @transform_6, window_bounds = array<i64: 3, 1, 256>}, {pipeline_mode = #tpu.pipeline_mode<synchronous>, transform_indices = @transform_7, window_bounds = array<i64: 256, 128>}, {pipeline_mode = #tpu.pipeline_mode<synchronous>, transform_indices = @transform_8, window_bounds = array<i64: 1, 128>}, {transform_indices = @transform_9, window_bounds = array<i64: 32, 128>}]} {
    %c0 = arith.constant 0 : index
    %c0_0 = arith.constant 0 : index
    %0 = vector.load %arg1[%c0, %c0_0] : memref<32x2xf32, #tpu.memory_space<vmem>>, vector<32x2xf32>
    %c0_1 = arith.constant 0 : index
    %c0_2 = arith.constant 0 : index
    %1 = vector.load %arg2[%c0_1, %c0_2] : memref<2x256xf32, #tpu.memory_space<vmem>>, vector<2x256xf32>
    %2 = vector.extract_strided_slice %0 {offsets = [0, 0], sizes = [32, 1], strides = [1, 1]} : vector<32x2xf32> to vector<32x1xf32>
    %3 = vector.extract_strided_slice %1 {offsets = [0, 0], sizes = [1, 256], strides = [1, 1]} : vector<2x256xf32> to vector<1x256xf32>
    %4 = vector.broadcast %2 : vector<32x1xf32> to vector<32x256xf32>
    %5 = vector.broadcast %3 : vector<1x256xf32> to vector<32x256xf32>
    %6 = arith.mulf %4, %5 : vector<32x256xf32>
    %7 = vector.extract_strided_slice %0 {offsets = [0, 1], sizes = [32, 1], strides = [1, 1]} : vector<32x2xf32> to vector<32x1xf32>
    %8 = vector.extract_strided_slice %1 {offsets = [1, 0], sizes = [1, 256], strides = [1, 1]} : vector<2x256xf32> to vector<1x256xf32>
    %9 = vector.broadcast %7 : vector<32x1xf32> to vector<32x256xf32>
    %10 = vector.broadcast %8 : vector<1x256xf32> to vector<32x256xf32>
    %11 = arith.mulf %9, %10 : vector<32x256xf32>
    %12 = arith.addf %6, %11 : vector<32x256xf32>
    %c0_3 = arith.constant 0 : index
    %c0_4 = arith.constant 0 : index
    %13 = vector.load %arg3[%c0_3, %c0_4] : memref<1x256xf32, #tpu.memory_space<vmem>>, vector<1x256xf32>
    %14 = vector.broadcast %13 : vector<1x256xf32> to vector<32x256xf32>
    %15 = arith.addf %12, %14 : vector<32x256xf32>
    %16 = math.tanh %15 : vector<32x256xf32>
    %17 = arith.truncf %16 : vector<32x256xf32> to vector<32x256xbf16>
    %c0_5 = arith.constant 0 : index
    %c0_6 = arith.constant 0 : index
    %c0_7 = arith.constant 0 : index
    %18 = vector.load %arg4[%c0_5, %c0_6, %c0_7] : memref<3x256x256xbf16, #tpu.memory_space<vmem>>, vector<1x256x256xbf16>
    %19 = vector.shape_cast %18 : vector<1x256x256xbf16> to vector<256x256xbf16>
    %cst = arith.constant dense<0.000000e+00> : vector<32x256xf32>
    %20 = tpu.matmul %17, %19, %cst {dimension_numbers = #tpu.dot_dimension_numbers<[1], [0], [0], [1], [0, 0, 1, 1], [], []>} : vector<32x256xbf16>, vector<256x256xbf16>, vector<32x256xf32> -> vector<32x256xf32>
    %c0_8 = arith.constant 0 : index
    %c0_9 = arith.constant 0 : index
    %c0_10 = arith.constant 0 : index
    %21 = vector.load %arg5[%c0_8, %c0_9, %c0_10] : memref<3x1x256xf32, #tpu.memory_space<vmem>>, vector<1x1x256xf32>
    %22 = vector.shape_cast %21 : vector<1x1x256xf32> to vector<1x256xf32>
    %23 = vector.broadcast %22 : vector<1x256xf32> to vector<32x256xf32>
    %24 = arith.addf %20, %23 : vector<32x256xf32>
    %25 = math.tanh %24 : vector<32x256xf32>
    %26 = arith.truncf %25 : vector<32x256xf32> to vector<32x256xbf16>
    %c0_11 = arith.constant 0 : index
    %c0_12 = arith.constant 0 : index
    %c0_13 = arith.constant 0 : index
    %27 = vector.load %arg6[%c0_11, %c0_12, %c0_13] : memref<3x256x256xbf16, #tpu.memory_space<vmem>>, vector<1x256x256xbf16>
    %28 = vector.shape_cast %27 : vector<1x256x256xbf16> to vector<256x256xbf16>
    %cst_14 = arith.constant dense<0.000000e+00> : vector<32x256xf32>
    %29 = tpu.matmul %26, %28, %cst_14 {dimension_numbers = #tpu.dot_dimension_numbers<[1], [0], [0], [1], [0, 0, 1, 1], [], []>} : vector<32x256xbf16>, vector<256x256xbf16>, vector<32x256xf32> -> vector<32x256xf32>
    %c0_15 = arith.constant 0 : index
    %c0_16 = arith.constant 0 : index
    %c0_17 = arith.constant 0 : index
    %30 = vector.load %arg7[%c0_15, %c0_16, %c0_17] : memref<3x1x256xf32, #tpu.memory_space<vmem>>, vector<1x1x256xf32>
    %31 = vector.shape_cast %30 : vector<1x1x256xf32> to vector<1x256xf32>
    %32 = vector.broadcast %31 : vector<1x256xf32> to vector<32x256xf32>
    %33 = arith.addf %29, %32 : vector<32x256xf32>
    %34 = arith.addf %33, %16 : vector<32x256xf32>
    %35 = arith.truncf %34 : vector<32x256xf32> to vector<32x256xbf16>
    %c1 = arith.constant 1 : index
    %c0_18 = arith.constant 0 : index
    %c0_19 = arith.constant 0 : index
    %36 = vector.load %arg4[%c1, %c0_18, %c0_19] : memref<3x256x256xbf16, #tpu.memory_space<vmem>>, vector<1x256x256xbf16>
    %37 = vector.shape_cast %36 : vector<1x256x256xbf16> to vector<256x256xbf16>
    %cst_20 = arith.constant dense<0.000000e+00> : vector<32x256xf32>
    %38 = tpu.matmul %35, %37, %cst_20 {dimension_numbers = #tpu.dot_dimension_numbers<[1], [0], [0], [1], [0, 0, 1, 1], [], []>} : vector<32x256xbf16>, vector<256x256xbf16>, vector<32x256xf32> -> vector<32x256xf32>
    %c1_21 = arith.constant 1 : index
    %c0_22 = arith.constant 0 : index
    %c0_23 = arith.constant 0 : index
    %39 = vector.load %arg5[%c1_21, %c0_22, %c0_23] : memref<3x1x256xf32, #tpu.memory_space<vmem>>, vector<1x1x256xf32>
    %40 = vector.shape_cast %39 : vector<1x1x256xf32> to vector<1x256xf32>
    %41 = vector.broadcast %40 : vector<1x256xf32> to vector<32x256xf32>
    %42 = arith.addf %38, %41 : vector<32x256xf32>
    %43 = math.tanh %42 : vector<32x256xf32>
    %44 = arith.truncf %43 : vector<32x256xf32> to vector<32x256xbf16>
    %c1_24 = arith.constant 1 : index
    %c0_25 = arith.constant 0 : index
    %c0_26 = arith.constant 0 : index
    %45 = vector.load %arg6[%c1_24, %c0_25, %c0_26] : memref<3x256x256xbf16, #tpu.memory_space<vmem>>, vector<1x256x256xbf16>
    %46 = vector.shape_cast %45 : vector<1x256x256xbf16> to vector<256x256xbf16>
    %cst_27 = arith.constant dense<0.000000e+00> : vector<32x256xf32>
    %47 = tpu.matmul %44, %46, %cst_27 {dimension_numbers = #tpu.dot_dimension_numbers<[1], [0], [0], [1], [0, 0, 1, 1], [], []>} : vector<32x256xbf16>, vector<256x256xbf16>, vector<32x256xf32> -> vector<32x256xf32>
    %c1_28 = arith.constant 1 : index
    %c0_29 = arith.constant 0 : index
    %c0_30 = arith.constant 0 : index
    %48 = vector.load %arg7[%c1_28, %c0_29, %c0_30] : memref<3x1x256xf32, #tpu.memory_space<vmem>>, vector<1x1x256xf32>
    %49 = vector.shape_cast %48 : vector<1x1x256xf32> to vector<1x256xf32>
    %50 = vector.broadcast %49 : vector<1x256xf32> to vector<32x256xf32>
    %51 = arith.addf %47, %50 : vector<32x256xf32>
    %52 = arith.addf %51, %34 : vector<32x256xf32>
    %53 = arith.truncf %52 : vector<32x256xf32> to vector<32x256xbf16>
    %c2 = arith.constant 2 : index
    %c0_31 = arith.constant 0 : index
    %c0_32 = arith.constant 0 : index
    %54 = vector.load %arg4[%c2, %c0_31, %c0_32] : memref<3x256x256xbf16, #tpu.memory_space<vmem>>, vector<1x256x256xbf16>
    %55 = vector.shape_cast %54 : vector<1x256x256xbf16> to vector<256x256xbf16>
    %cst_33 = arith.constant dense<0.000000e+00> : vector<32x256xf32>
    %56 = tpu.matmul %53, %55, %cst_33 {dimension_numbers = #tpu.dot_dimension_numbers<[1], [0], [0], [1], [0, 0, 1, 1], [], []>} : vector<32x256xbf16>, vector<256x256xbf16>, vector<32x256xf32> -> vector<32x256xf32>
    %c2_34 = arith.constant 2 : index
    %c0_35 = arith.constant 0 : index
    %c0_36 = arith.constant 0 : index
    %57 = vector.load %arg5[%c2_34, %c0_35, %c0_36] : memref<3x1x256xf32, #tpu.memory_space<vmem>>, vector<1x1x256xf32>
    %58 = vector.shape_cast %57 : vector<1x1x256xf32> to vector<1x256xf32>
    %59 = vector.broadcast %58 : vector<1x256xf32> to vector<32x256xf32>
    %60 = arith.addf %56, %59 : vector<32x256xf32>
    %61 = math.tanh %60 : vector<32x256xf32>
    %62 = arith.truncf %61 : vector<32x256xf32> to vector<32x256xbf16>
    %c2_37 = arith.constant 2 : index
    %c0_38 = arith.constant 0 : index
    %c0_39 = arith.constant 0 : index
    %63 = vector.load %arg6[%c2_37, %c0_38, %c0_39] : memref<3x256x256xbf16, #tpu.memory_space<vmem>>, vector<1x256x256xbf16>
    %64 = vector.shape_cast %63 : vector<1x256x256xbf16> to vector<256x256xbf16>
    %cst_40 = arith.constant dense<0.000000e+00> : vector<32x256xf32>
    %65 = tpu.matmul %62, %64, %cst_40 {dimension_numbers = #tpu.dot_dimension_numbers<[1], [0], [0], [1], [0, 0, 1, 1], [], []>} : vector<32x256xbf16>, vector<256x256xbf16>, vector<32x256xf32> -> vector<32x256xf32>
    %c2_41 = arith.constant 2 : index
    %c0_42 = arith.constant 0 : index
    %c0_43 = arith.constant 0 : index
    %66 = vector.load %arg7[%c2_41, %c0_42, %c0_43] : memref<3x1x256xf32, #tpu.memory_space<vmem>>, vector<1x1x256xf32>
    %67 = vector.shape_cast %66 : vector<1x1x256xf32> to vector<1x256xf32>
    %68 = vector.broadcast %67 : vector<1x256xf32> to vector<32x256xf32>
    %69 = arith.addf %65, %68 : vector<32x256xf32>
    %70 = arith.addf %69, %52 : vector<32x256xf32>
    %71 = arith.truncf %70 : vector<32x256xf32> to vector<32x256xbf16>
    %c0_44 = arith.constant 0 : index
    %c0_45 = arith.constant 0 : index
    %72 = vector.load %arg8[%c0_44, %c0_45] : memref<256x128xbf16, #tpu.memory_space<vmem>>, vector<256x128xbf16>
    %cst_46 = arith.constant dense<0.000000e+00> : vector<32x128xf32>
    %73 = tpu.matmul %71, %72, %cst_46 {dimension_numbers = #tpu.dot_dimension_numbers<[1], [0], [0], [1], [0, 0, 1, 1], [], []>} : vector<32x256xbf16>, vector<256x128xbf16>, vector<32x128xf32> -> vector<32x128xf32>
    %c0_47 = arith.constant 0 : index
    %c0_48 = arith.constant 0 : index
    %74 = vector.load %arg9[%c0_47, %c0_48] : memref<1x128xf32, #tpu.memory_space<vmem>>, vector<1x128xf32>
    %75 = vector.broadcast %74 : vector<1x128xf32> to vector<32x128xf32>
    %76 = arith.addf %73, %75 : vector<32x128xf32>
    %c0_49 = arith.constant 0 : index
    %c0_50 = arith.constant 0 : index
    %77 = vector.load %arg10[%c0_49, %c0_50] : memref<32x128xf32, #tpu.memory_space<vmem>>, vector<32x128xf32>
    tpu.vector_store %arg10[%c0_49, %c0_50], %76 {strides = array<i32>} : memref<32x128xf32, #tpu.memory_space<vmem>>, vector<32x128xf32>,
    return
  }
  func.func @transform_0(%arg0: i32) -> (i32, i32) {
    %c0_i32 = arith.constant 0 : i32
    %c0_i32_0 = arith.constant 0 : i32
    return %arg0, %c0_i32 : i32, i32
  }
  func.func @transform_1(%arg0: i32) -> (i32, i32) {
    %c0_i32 = arith.constant 0 : i32
    %c0_i32_0 = arith.constant 0 : i32
    %c0_i32_1 = arith.constant 0 : i32
    return %c0_i32, %c0_i32_0 : i32, i32
  }
  func.func @transform_2(%arg0: i32) -> (i32, i32) {
    %c0_i32 = arith.constant 0 : i32
    %c0_i32_0 = arith.constant 0 : i32
    %c0_i32_1 = arith.constant 0 : i32
    return %c0_i32, %c0_i32_0 : i32, i32
  }
  func.func @transform_3(%arg0: i32) -> (i32, i32, i32) {
    %c0_i32 = arith.constant 0 : i32
    %c0_i32_0 = arith.constant 0 : i32
    %c0_i32_1 = arith.constant 0 : i32
    %c0_i32_2 = arith.constant 0 : i32
    return %c0_i32, %c0_i32_0, %c0_i32_1 : i32, i32, i32
  }
  func.func @transform_4(%arg0: i32) -> (i32, i32, i32) {
    %c0_i32 = arith.constant 0 : i32
    %c0_i32_0 = arith.constant 0 : i32
    %c0_i32_1 = arith.constant 0 : i32
    %c0_i32_2 = arith.constant 0 : i32
    return %c0_i32, %c0_i32_0, %c0_i32_1 : i32, i32, i32
  }
  func.func @transform_5(%arg0: i32) -> (i32, i32, i32) {
    %c0_i32 = arith.constant 0 : i32
    %c0_i32_0 = arith.constant 0 : i32
    %c0_i32_1 = arith.constant 0 : i32
    %c0_i32_2 = arith.constant 0 : i32
    return %c0_i32, %c0_i32_0, %c0_i32_1 : i32, i32, i32
  }
  func.func @transform_6(%arg0: i32) -> (i32, i32, i32) {
    %c0_i32 = arith.constant 0 : i32
    %c0_i32_0 = arith.constant 0 : i32
    %c0_i32_1 = arith.constant 0 : i32
    %c0_i32_2 = arith.constant 0 : i32
    return %c0_i32, %c0_i32_0, %c0_i32_1 : i32, i32, i32
  }
  func.func @transform_7(%arg0: i32) -> (i32, i32) {
    %c0_i32 = arith.constant 0 : i32
    %c0_i32_0 = arith.constant 0 : i32
    %c0_i32_1 = arith.constant 0 : i32
    return %c0_i32, %c0_i32_0 : i32, i32
  }
  func.func @transform_8(%arg0: i32) -> (i32, i32) {
    %c0_i32 = arith.constant 0 : i32
    %c0_i32_0 = arith.constant 0 : i32
    %c0_i32_1 = arith.constant 0 : i32
    return %c0_i32, %c0_i32_0 : i32, i32
  }
  func.func @transform_9(%arg0: i32) -> (i32, i32) {
    %c0_i32 = arith.constant 0 : i32
    %c0_i32_0 = arith.constant 0 : i32
    return %arg0, %c0_i32 : i32, i32
  }
}

</mosaic_0001>

<llo_original>
// kernel: tpu_custom_call.1
$region0: #{tpu_custom_call.1}
  #allocation0 [shape = 'u32[]', space=smem, size = 0x4, offset = 0x4, fixed_abs, tag = 'smem constant byte address 0x4 - core index']
  #allocation1 [shape = 'u32[144,128]{1,0:T(1,128)}', space=vmem, size = 0x12000, scoped, tag = 'internal scratch']
  %s0 = inlined_call_operand.vmem [shape: f32[64,2], index: 0, kind: input, shape index: {}]
  %s1 = inlined_call_operand.vmem [shape: f32[2,256], index: 1, kind: input, shape index: {}]
  %s2 = inlined_call_operand.vmem [shape: f32[1,256], index: 2, kind: input, shape index: {}]
  %s3 = inlined_call_operand.hbm [shape: bf16[3,256,256], index: 3, kind: input, shape index: {}]
  %s4 = inlined_call_operand.vmem [shape: f32[3,1,256], index: 4, kind: input, shape index: {}]
  %s5 = inlined_call_operand.hbm [shape: bf16[3,256,256], index: 5, kind: input, shape index: {}]
  %s6 = inlined_call_operand.vmem [shape: f32[3,1,256], index: 6, kind: input, shape index: {}]
  %s7 = inlined_call_operand.hbm [shape: bf16[256,128], index: 7, kind: input, shape index: {}]
  %s8 = inlined_call_operand.vmem [shape: f32[1,128], index: 8, kind: input, shape index: {}]
  %s9 = inlined_call_operand.hbm [shape: f32[64,128], index: 9, kind: output, shape index: {}]
  %s10 = sld [smem:[#allocation0]]
  $region81: #{tpu_custom_call.1} parent=0
    _
  %s12 = ssub.s32 1, %s10
  %s13 = scalar_select 0, %s12, %s10
  $region1: #{tpu_custom_call.1} parent=0
    #allocation2 [shape = 'u8[393216]{0}', space=vmem, size = 0x60000, scoped, tag = 'input window, operand 3, single buffered']
    #allocation3 [shape = 's32[2]{0}', space=sflag, size = 0x8, scoped, tag = 'scoped memory for tpu_custom_call.1']
    #allocation4 [shape = 's32[2]{0}', space=sflag, size = 0x8, scoped, tag = 'scoped memory for tpu_custom_call.1']
    #allocation5 [shape = 'u8[393216]{0}', space=vmem, size = 0x60000, scoped, tag = 'input window, operand 5, single buffered']
    #allocation6 [shape = 's32[1]{0}', space=sflag, size = 0x4, scoped, tag = 'scoped memory for tpu_custom_call.1']
    #allocation7 [shape = 'u8[65536]{0}', space=vmem, size = 0x10000, scoped, tag = 'input window, operand 7, single buffered']
    #allocation8 [shape = 'u8[32768]{0}', space=vmem, size = 0x8000, scoped, tag = 'output window, operand 0']
    %14 = vsyncpa [#allocation3], 0
    %15 = vsyncpa [#allocation6], 0
    %16 = vsyncpa [#allocation4], 0
    %s17 = scalar_lea.sflag [#allocation4], 1
    %18 = vsyncpa %s17, 0
    loop: start=0, step=1, limit=4
    $region2: #{tpu_custom_call.1} parent=1 // loop_pre_header
      _
    $region3: #{tpu_custom_call.1} parent=1 // loop_header
      %s20 = sphi 0, %s24
      %p21 = scmp.ge.s32.totalorder %s20, 4
      %s30 = sphi 0, %s32
      %s33 = sphi 0, %s30
      %s34 = sphi 0, %s33
      %s50 = sphi 0, %s34
      %s54 = sphi 0, %s54
      %s56 = sphi 0, %s54
      %s57 = sphi 0, %s56
      %s71 = sphi 0, %s57
      %s75 = sphi 0, %s75
      %s77 = sphi 0, %s75
      %s78 = sphi 0, %s77
      %s92 = sphi 0, %s78
      %s96 = sphi 0, %s96
      %s98 = sphi 0, %s96
      %s99 = sphi 0, %s98
      %s113 = sphi 0, %s99
      %s117 = sphi 0, %s117
      %s119 = sphi 0, %s117
      %s120 = sphi 0, %s119
      %s134 = sphi 0, %s120
      %s138 = sphi 0, %s138
      %s140 = sphi 0, %s138
      %s141 = sphi 0, %s140
      %s155 = sphi 0, %s141
      %s159 = sphi 0, %s159
      %s161 = sphi 0, %s159
      %s162 = sphi 0, %s161
      %s176 = sphi 0, %s162
      %s180 = sphi 0, %s180
      %s182 = sphi 0, %s180
      %s183 = sphi 0, %s182
      %s197 = sphi 0, %s183
      %s201 = sphi 0, %s201
      %s203 = sphi 0, %s201
      %s204 = sphi 0, %s203
      %s218 = sphi 0, %s204
      %s224 = sphi 0, %s226
      %s227 = sphi 0, %s224
      %s228 = sphi 0, %s227
      %s244 = sphi 0, %s228
    $region4: #{tpu_custom_call.1} parent=1 // loop_header_branch
      %23 = sbr.rel (%p21) target = $region8
    $region5: #{tpu_custom_call.1} parent=1 // loop_body
      %s25 = ssub.s32 %s20, 1
      %s26 = ssub.s32 %s20, 2
      %s27 = sadd.s32 %s20, 1
      %s28 = ssub.s32 %s20, %s27
      %p29 = scmp.eq.s32.totalorder %s28, 0
      %s31 = sadd.s32 %s30, 1
      %s32 = scalar_select %p29, %s30, %s31
      %p35 = pneg %p29
      %p36 = scmp.eq.s32.totalorder %s20, 1
      %p37 = por %p35, %p36
      %p38 = scmp.ne.s32.totalorder %s30, %s33
      %p39 = scmp.eq.s32.totalorder %s20, 0
      %p40 = por %p38, %p39
      %p41 = scmp.ne.s32.totalorder %s30, %s33
      %p42 = scmp.eq.s32.totalorder %s25, 1
      %p43 = por %p41, %p42
      %p44 = scmp.ne.s32.totalorder %s33, %s34
      %p45 = scmp.eq.s32.totalorder %s25, 0
      %p46 = por %p44, %p45
      %p47 = scmp.ne.s32.totalorder %s33, %s34
      %p48 = scmp.eq.s32.totalorder %s26, 1
      %p49 = por %p47, %p48
      %p51 = scmp.ne.s32.totalorder %s34, %s50
      %p52 = scmp.eq.s32.totalorder %s26, 0
      %p53 = por %p51, %p52
      %s55 = sadd.s32 %s54, 1
      %p58 = scmp.eq.s32.totalorder %s20, 1
      %p59 = scmp.ne.s32.totalorder %s54, %s56
      %p60 = scmp.eq.s32.totalorder %s20, 0
      %p61 = por %p59, %p60
      %p62 = scmp.ne.s32.totalorder %s54, %s56
      %p63 = scmp.eq.s32.totalorder %s25, 1
      %p64 = por %p62, %p63
      %p65 = scmp.ne.s32.totalorder %s56, %s57
      %p66 = scmp.eq.s32.totalorder %s25, 0
      %p67 = por %p65, %p66
      %p68 = scmp.ne.s32.totalorder %s56, %s57
      %p69 = scmp.eq.s32.totalorder %s26, 1
      %p70 = por %p68, %p69
      %p72 = scmp.ne.s32.totalorder %s57, %s71
      %p73 = scmp.eq.s32.totalorder %s26, 0
      %p74 = por %p72, %p73
      %s76 = sadd.s32 %s75, 1
      %p79 = scmp.eq.s32.totalorder %s20, 1
      %p80 = scmp.ne.s32.totalorder %s75, %s77
      %p81 = scmp.eq.s32.totalorder %s20, 0
      %p82 = por %p80, %p81
      %p83 = scmp.ne.s32.totalorder %s75, %s77
      %p84 = scmp.eq.s32.totalorder %s25, 1
      %p85 = por %p83, %p84
      %p86 = scmp.ne.s32.totalorder %s77, %s78
      %p87 = scmp.eq.s32.totalorder %s25, 0
      %p88 = por %p86, %p87
      %p89 = scmp.ne.s32.totalorder %s77, %s78
      %p90 = scmp.eq.s32.totalorder %s26, 1
      %p91 = por %p89, %p90
      %p93 = scmp.ne.s32.totalorder %s78, %s92
      %p94 = scmp.eq.s32.totalorder %s26, 0
      %p95 = por %p93, %p94
      %s97 = sadd.s32 %s96, 1
      %p100 = scmp.eq.s32.totalorder %s20, 1
      %p101 = scmp.ne.s32.totalorder %s96, %s98
      %p102 = scmp.eq.s32.totalorder %s20, 0
      %p103 = por %p101, %p102
      %p104 = scmp.ne.s32.totalorder %s96, %s98
      %p105 = scmp.eq.s32.totalorder %s25, 1
      %p106 = por %p104, %p105
      %p107 = scmp.ne.s32.totalorder %s98, %s99
      %p108 = scmp.eq.s32.totalorder %s25, 0
      %p109 = por %p107, %p108
      %p110 = scmp.ne.s32.totalorder %s98, %s99
      %p111 = scmp.eq.s32.totalorder %s26, 1
      %p112 = por %p110, %p111
      %p114 = scmp.ne.s32.totalorder %s99, %s113
      %p115 = scmp.eq.s32.totalorder %s26, 0
      %p116 = por %p114, %p115
      %s118 = sadd.s32 %s117, 1
      %p121 = scmp.eq.s32.totalorder %s20, 1
      %p122 = scmp.ne.s32.totalorder %s117, %s119
      %p123 = scmp.eq.s32.totalorder %s20, 0
      %p124 = por %p122, %p123
      %p125 = scmp.ne.s32.totalorder %s117, %s119
      %p126 = scmp.eq.s32.totalorder %s25, 1
      %p127 = por %p125, %p126
      %p128 = scmp.ne.s32.totalorder %s119, %s120
      %p129 = scmp.eq.s32.totalorder %s25, 0
      %p130 = por %p128, %p129
      %p131 = scmp.ne.s32.totalorder %s119, %s120
      %p132 = scmp.eq.s32.totalorder %s26, 1
      %p133 = por %p131, %p132
      %p135 = scmp.ne.s32.totalorder %s120, %s134
      %p136 = scmp.eq.s32.totalorder %s26, 0
      %p137 = por %p135, %p136
      %s139 = sadd.s32 %s138, 1
      %p142 = scmp.eq.s32.totalorder %s20, 1
      %p143 = scmp.ne.s32.totalorder %s138, %s140
      %p144 = scmp.eq.s32.totalorder %s20, 0
      %p145 = por %p143, %p144
      %p146 = scmp.ne.s32.totalorder %s138, %s140
      %p147 = scmp.eq.s32.totalorder %s25, 1
      %p148 = por %p146, %p147
      %p149 = scmp.ne.s32.totalorder %s140, %s141
      %p150 = scmp.eq.s32.totalorder %s25, 0
      %p151 = por %p149, %p150
      %p152 = scmp.ne.s32.totalorder %s140, %s141
      %p153 = scmp.eq.s32.totalorder %s26, 1
      %p154 = por %p152, %p153
      %p156 = scmp.ne.s32.totalorder %s141, %s155
      %p157 = scmp.eq.s32.totalorder %s26, 0
      %p158 = por %p156, %p157
      %s160 = sadd.s32 %s159, 1
      %p163 = scmp.eq.s32.totalorder %s20, 1
      %p164 = scmp.ne.s32.totalorder %s159, %s161
      %p165 = scmp.eq.s32.totalorder %s20, 0
      %p166 = por %p164, %p165
      %p167 = scmp.ne.s32.totalorder %s159, %s161
      %p168 = scmp.eq.s32.totalorder %s25, 1
      %p169 = por %p167, %p168
      %p170 = scmp.ne.s32.totalorder %s161, %s162
      %p171 = scmp.eq.s32.totalorder %s25, 0
      %p172 = por %p170, %p171
      %p173 = scmp.ne.s32.totalorder %s161, %s162
      %p174 = scmp.eq.s32.totalorder %s26, 1
      %p175 = por %p173, %p174
      %p177 = scmp.ne.s32.totalorder %s162, %s176
      %p178 = scmp.eq.s32.totalorder %s26, 0
      %p179 = por %p177, %p178
      %s181 = sadd.s32 %s180, 1
      %p184 = scmp.eq.s32.totalorder %s20, 1
      %p185 = scmp.ne.s32.totalorder %s180, %s182
      %p186 = scmp.eq.s32.totalorder %s20, 0
      %p187 = por %p185, %p186
      %p188 = scmp.ne.s32.totalorder %s180, %s182
      %p189 = scmp.eq.s32.totalorder %s25, 1
      %p190 = por %p188, %p189
      %p191 = scmp.ne.s32.totalorder %s182, %s183
      %p192 = scmp.eq.s32.totalorder %s25, 0
      %p193 = por %p191, %p192
      %p194 = scmp.ne.s32.totalorder %s182, %s183
      %p195 = scmp.eq.s32.totalorder %s26, 1
      %p196 = por %p194, %p195
      %p198 = scmp.ne.s32.totalorder %s183, %s197
      %p199 = scmp.eq.s32.totalorder %s26, 0
      %p200 = por %p198, %p199
      %s202 = sadd.s32 %s201, 1
      %p205 = scmp.eq.s32.totalorder %s20, 1
      %p206 = scmp.ne.s32.totalorder %s201, %s203
      %p207 = scmp.eq.s32.totalorder %s20, 0
      %p208 = por %p206, %p207
      %p209 = scmp.ne.s32.totalorder %s201, %s203
      %p210 = scmp.eq.s32.totalorder %s25, 1
      %p211 = por %p209, %p210
      %p212 = scmp.ne.s32.totalorder %s203, %s204
      %p213 = scmp.eq.s32.totalorder %s25, 0
      %p214 = por %p212, %p213
      %p215 = scmp.ne.s32.totalorder %s203, %s204
      %p216 = scmp.eq.s32.totalorder %s26, 1
      %p217 = por %p215, %p216
      %p219 = scmp.ne.s32.totalorder %s204, %s218
      %p220 = scmp.eq.s32.totalorder %s26, 0
      %p221 = por %p219, %p220
      %s222 = ssub.s32 %s20, %s27
      %p223 = scmp.eq.s32.totalorder %s222, 0
      %s225 = sadd.s32 %s224, 1
      %s226 = scalar_select %p223, %s224, %s225
      %p229 = pneg %p223
      %p230 = scmp.eq.s32.totalorder %s20, 1
      %p231 = por %p229, %p230
      %p232 = scmp.ne.s32.totalorder %s224, %s227
      %p233 = scmp.eq.s32.totalorder %s20, 0
      %p234 = por %p232, %p233
      %p235 = scmp.ne.s32.totalorder %s224, %s227
      %p236 = scmp.eq.s32.totalorder %s25, 1
      %p237 = por %p235, %p236
      %p238 = scmp.ne.s32.totalorder %s227, %s228
      %p239 = scmp.eq.s32.totalorder %s25, 0
      %p240 = por %p238, %p239
      %p241 = scmp.ne.s32.totalorder %s227, %s228
      %p242 = scmp.eq.s32.totalorder %s26, 1
      %p243 = por %p241, %p242
      %p245 = scmp.ne.s32.totalorder %s228, %s244
      %p246 = scmp.eq.s32.totalorder %s26, 0
      %p247 = por %p245, %p246
      %p248 = scmp.le.s32.totalorder 1, %s20
      %p249 = scmp.lt.s32.totalorder %s20, 3
      %p250 = pnand %p248, %p249
      %p251 = pneg %p250
      // Predicated region
      $region9: #{tpu_custom_call.1} parent=5 // pred_check
        _
      $region10: #{tpu_custom_call.1} parent=5 // pred_check_branch
        %253 = sbr.rel (%p250) target = $region12
      $region11: #{tpu_custom_call.1} parent=5 // pred_region
        %s254 = ssub.s32 %s20, 1
        // Predicated region
        $region13: #{tpu_custom_call.1} parent=11 // pred_check
          %p255 = pneg %p67
        $region14: #{tpu_custom_call.1} parent=11 // pred_check_branch
          %257 = sbr.rel (%p255) target = $region16
        $region15: #{tpu_custom_call.1} parent=11 // pred_region
          _
        $region16: #{tpu_custom_call.1} parent=11 // pred_fallthru
          _
        // Predicated region
        $region17: #{tpu_custom_call.1} parent=11 // pred_check
          %p258 = pneg %p88
        $region18: #{tpu_custom_call.1} parent=11 // pred_check_branch
          %260 = sbr.rel (%p258) target = $region20
        $region19: #{tpu_custom_call.1} parent=11 // pred_region
          _
        $region20: #{tpu_custom_call.1} parent=11 // pred_fallthru
          _
        // Predicated region
        $region21: #{tpu_custom_call.1} parent=11 // pred_check
          %p261 = pneg %p109
        $region22: #{tpu_custom_call.1} parent=11 // pred_check_branch
          %263 = sbr.rel (%p261) target = $region24
        $region23: #{tpu_custom_call.1} parent=11 // pred_region
          %s265 = ssub.s32 12288, 12288
          %266 = vsyncadd [#allocation3], %s265
          %s267 = sshll.u32 [#allocation2], 4
          %s268 = int_to_ptr.vmem [resolvable:$true] %s267
          %273 = dma.hbm_to_vmem [thread:$0]  %s3, 12288, %s268, [#allocation3], 128, 128, 8
        $region24: #{tpu_custom_call.1} parent=11 // pred_fallthru
          _
        // Predicated region
        $region25: #{tpu_custom_call.1} parent=11 // pred_check
          %p274 = pneg %p130
        $region26: #{tpu_custom_call.1} parent=11 // pred_check_branch
          %276 = sbr.rel (%p274) target = $region28
        $region27: #{tpu_custom_call.1} parent=11 // pred_region
          _
        $region28: #{tpu_custom_call.1} parent=11 // pred_fallthru
          _
        // Predicated region
        $region29: #{tpu_custom_call.1} parent=11 // pred_check
          %p277 = pneg %p151
        $region30: #{tpu_custom_call.1} parent=11 // pred_check_branch
          %279 = sbr.rel (%p277) target = $region32
        $region31: #{tpu_custom_call.1} parent=11 // pred_region
          %s281 = ssub.s32 12288, 12288
          %282 = vsyncadd [#allocation6], %s281
          %s283 = sshll.u32 [#allocation5], 4
          %s284 = int_to_ptr.vmem [resolvable:$true] %s283
          %289 = dma.hbm_to_vmem [thread:$0]  %s5, 12288, %s284, [#allocation6], 128, 128, 8
        $region32: #{tpu_custom_call.1} parent=11 // pred_fallthru
          _
        // Predicated region
        $region33: #{tpu_custom_call.1} parent=11 // pred_check
          %p290 = pneg %p172
        $region34: #{tpu_custom_call.1} parent=11 // pred_check_branch
          %292 = sbr.rel (%p290) target = $region36
        $region35: #{tpu_custom_call.1} parent=11 // pred_region
          _
        $region36: #{tpu_custom_call.1} parent=11 // pred_fallthru
          _
        // Predicated region
        $region37: #{tpu_custom_call.1} parent=11 // pred_check
          %p293 = pneg %p193
        $region38: #{tpu_custom_call.1} parent=11 // pred_check_branch
          %295 = sbr.rel (%p293) target = $region40
        $region39: #{tpu_custom_call.1} parent=11 // pred_region
          %s297 = ssub.s32 2048, 2048
          %298 = vsyncadd [#allocation6], %s297
          %s299 = sshll.u32 [#allocation7], 4
          %s300 = int_to_ptr.vmem [resolvable:$true] %s299
          %305 = dma.hbm_to_vmem [thread:$0]  %s7, 2048, %s300, [#allocation6], 64, 64, 4
        $region40: #{tpu_custom_call.1} parent=11 // pred_fallthru
          _
        // Predicated region
        $region41: #{tpu_custom_call.1} parent=11 // pred_check
          %p306 = pneg %p214
        $region42: #{tpu_custom_call.1} parent=11 // pred_check_branch
          %308 = sbr.rel (%p306) target = $region44
        $region43: #{tpu_custom_call.1} parent=11 // pred_region
          _
        $region44: #{tpu_custom_call.1} parent=11 // pred_fallthru
          _
      $region12: #{tpu_custom_call.1} parent=5 // pred_fallthru
        _
      %p309 = scmp.lt.s32.totalorder %s20, 2
      // Predicated region
      $region45: #{tpu_custom_call.1} parent=5 // pred_check
        %p310 = pneg %p309
      $region46: #{tpu_custom_call.1} parent=5 // pred_check_branch
        %312 = sbr.rel (%p310) target = $region48
      $region47: #{tpu_custom_call.1} parent=5 // pred_region
        // Predicated region
        $region49: #{tpu_custom_call.1} parent=47 // pred_check
          %p313 = pneg %p40
        $region50: #{tpu_custom_call.1} parent=47 // pred_check_branch
          %315 = sbr.rel (%p313) target = $region52
        $region51: #{tpu_custom_call.1} parent=47 // pred_region
          %s316 = smul.u32 4, %s20
          %p317 = scmp.lt.s32.totalorder %s316, 7
          %s318 = scalar_select %p317, %s316, 7
          %s319 = smul.addr %s318, 8
          %s320 = scalar_lea.vmem %s0, %s319
          %s321 = smul.u32 4, %s20
        $region52: #{tpu_custom_call.1} parent=47 // pred_fallthru
          _
      $region48: #{tpu_custom_call.1} parent=5 // pred_fallthru
        _
      %p322 = scmp.le.s32.totalorder 1, %s20
      %p323 = scmp.lt.s32.totalorder %s20, 3
      %p324 = pnand %p322, %p323
      %p325 = pneg %p324
      // Predicated region
      $region53: #{tpu_custom_call.1} parent=5 // pred_check
        _
      $region54: #{tpu_custom_call.1} parent=5 // pred_check_branch
        %327 = sbr.rel (%p324) target = $region56
      $region55: #{tpu_custom_call.1} parent=5 // pred_region
        %s328 = ssub.s32 %s20, 1
        // Predicated region
        $region57: #{tpu_custom_call.1} parent=55 // pred_check
          %p329 = pneg %p109
        $region58: #{tpu_custom_call.1} parent=55 // pred_check_branch
          %331 = sbr.rel (%p329) target = $region60
        $region59: #{tpu_custom_call.1} parent=55 // pred_region
          %332 = dma.done [#allocation3], 12288
        $region60: #{tpu_custom_call.1} parent=55 // pred_fallthru
          _
        // Predicated region
        $region61: #{tpu_custom_call.1} parent=55 // pred_check
          %p333 = pneg %p151
        $region62: #{tpu_custom_call.1} parent=55 // pred_check_branch
          %335 = sbr.rel (%p333) target = $region64
        $region63: #{tpu_custom_call.1} parent=55 // pred_region
          %336 = dma.done [#allocation6], 12288
        $region64: #{tpu_custom_call.1} parent=55 // pred_fallthru
          _
        // Predicated region
        $region65: #{tpu_custom_call.1} parent=55 // pred_check
          %p337 = pneg %p193
        $region66: #{tpu_custom_call.1} parent=55 // pred_check_branch
          %339 = sbr.rel (%p337) target = $region68
        $region67: #{tpu_custom_call.1} parent=55 // pred_region
          %340 = dma.done [#allocation6], 2048
        $region68: #{tpu_custom_call.1} parent=55 // pred_fallthru
          _
        %s341 = smul.u32 4, %s25
        %p342 = scmp.lt.s32.totalorder %s341, 7
        %s343 = scalar_select %p342, %s341, 7
        %s344 = smul.addr %s343, 8
        %s345 = scalar_lea.vmem %s0, %s344
        %p346 = pneg %p46
        %p347 = pneg %p43
        %p348 = pneg %p67
        %p349 = pneg %p64
        %p350 = pneg %p88
        %p351 = pneg %p85
        %p352 = pneg %p109
        %p353 = pneg %p106
        %p354 = pneg %p130
        %p355 = pneg %p127
        %p356 = pneg %p151
        %p357 = pneg %p148
        %p358 = pneg %p172
        %p359 = pneg %p169
        %p360 = pneg %p193
        %p361 = pneg %p190
        %p362 = pneg %p214
        %p363 = pneg %p211
        %p364 = pneg %p240
        %p365 = pneg %p237
        %s366 = sand.u32 %s227, 1
        %s367 = scalar_lea.sflag [#allocation4], %s366
        %s368 = sand.u32 %s227, 1
        %s369 = smul.addr %s368, 32
        %s370 = scalar_lea.vmem [#allocation8], %s369
        %s371 = smul.u32 4, %s25
        %p372 = scmp.lt.s32.totalorder %s371, 7
        %s373 = scalar_select %p372, %s371, 7
        %s374 = smul.addr %s373, 8
        %s375 = scalar_lea.vmem %s0, %s374
        %s376 = smul.u32 4, %s25
        %s377 = smul.u32 4, %s25
        %v379 = vld [vmem:[%s375] sm:$0xff]
        %v380 = vld [vmem:[%s375 + $0x8] sm:$0xff]
        %v381 = vld [vmem:[%s375 + $0x10] sm:$0xff]
        %v382 = vld [vmem:[%s375 + $0x18] sm:$0xff]
        %v383 = vld [vmem:[%s1] sm:$0xf]
        %385 = vset.pattern.permute.xlu0 0
        %386 = vperm.xlu0 %385, %v379
        %v387 = vpop.permute.xlu0 %386
        %390 = vset.pattern.permute.xlu0 0
        %391 = vperm.xlu0 %390, %v380
        %v392 = vpop.permute.xlu0 %391
        %395 = vset.pattern.permute.xlu0 0
        %396 = vperm.xlu0 %395, %v381
        %v397 = vpop.permute.xlu0 %396
        %400 = vset.pattern.permute.xlu0 0
        %401 = vperm.xlu0 %400, %v382
        %v402 = vpop.permute.xlu0 %401
        %v405 = vlaneseq
        %v406 = vshrl.u32 %v405, 7
        %v407 = vsub.s32 0, %v406
        %v408 = vrot.slane %v383, %v407
        %v409 = vlaneseq
        %v410 = vshrl.u32 %v409, 7
        %v411 = vsub.s32 2, %v410
        %v412 = vrot.slane %v383, %v411
        %v415 = vlaneseq
        %v416 = vshrl.u32 %v415, 7
        %v417 = vsub.s32 0, %v416
        %v418 = vrot.slane %v408, %v417
        %v419 = vlaneseq
        %v420 = vshrl.u32 %v419, 7
        %v421 = vsub.s32 0, %v420
        %v422 = vrot.slane %v412, %v421
        %v423 = vmul.f32 %v387, %v418
        %v424 = vmul.f32 %v387, %v422
        %v425 = vmul.f32 %v392, %v418
        %v426 = vmul.f32 %v392, %v422
        %v427 = vmul.f32 %v397, %v418
        %v428 = vmul.f32 %v397, %v422
        %v429 = vmul.f32 %v402, %v418
        %v430 = vmul.f32 %v402, %v422
        %431 = vset.pattern.permute.xlu0 1
        %432 = vperm.xlu0 %431, %v379
        %v433 = vpop.permute.xlu0 %432
        %435 = vset.pattern.permute.xlu0 1
        %436 = vperm.xlu0 %435, %v380
        %v437 = vpop.permute.xlu0 %436
        %439 = vset.pattern.permute.xlu0 1
        %440 = vperm.xlu0 %439, %v381
        %v441 = vpop.permute.xlu0 %440
        %443 = vset.pattern.permute.xlu0 1
        %444 = vperm.xlu0 %443, %v382
        %v445 = vpop.permute.xlu0 %444
        %v447 = vlaneseq
        %v448 = vshrl.u32 %v447, 7
        %v449 = vsub.s32 1, %v448
        %v450 = vrot.slane %v383, %v449
        %v451 = vlaneseq
        %v452 = vshrl.u32 %v451, 7
        %v453 = vsub.s32 3, %v452
        %v454 = vrot.slane %v383, %v453
        %v457 = vlaneseq
        %v458 = vshrl.u32 %v457, 7
        %v459 = vsub.s32 1, %v458
        %v460 = vrot.slane %v450, %v459
        %v461 = vlaneseq
        %v462 = vshrl.u32 %v461, 7
        %v463 = vsub.s32 1, %v462
        %v464 = vrot.slane %v454, %v463
        %v465 = vmul.f32 %v433, %v460
        %v466 = vmul.f32 %v433, %v464
        %v467 = vmul.f32 %v437, %v460
        %v468 = vmul.f32 %v437, %v464
        %v469 = vmul.f32 %v441, %v460
        %v470 = vmul.f32 %v441, %v464
        %v471 = vmul.f32 %v445, %v460
        %v472 = vmul.f32 %v445, %v464
        %v473 = vadd.f32 %v423, %v465
        %v474 = vadd.f32 %v424, %v466
        %v475 = vadd.f32 %v425, %v467
        %v476 = vadd.f32 %v426, %v468
        %v477 = vadd.f32 %v427, %v469
        %v478 = vadd.f32 %v428, %v470
        %v479 = vadd.f32 %v429, %v471
        %v480 = vadd.f32 %v430, %v472
        %v481 = vld [vmem:[%s2] sm:$0x3]
        %v483 = vlaneseq
        %v484 = vshrl.u32 %v483, 7
        %v485 = vsub.s32 0, %v484
        %v486 = vrot.slane %v481, %v485
        %v487 = vlaneseq
        %v488 = vshrl.u32 %v487, 7
        %v489 = vsub.s32 1, %v488
        %v490 = vrot.slane %v481, %v489
        %v493 = vadd.f32 %v473, %v486
        %v494 = vadd.f32 %v474, %v490
        %v495 = vadd.f32 %v475, %v486
        %v496 = vadd.f32 %v476, %v490
        %v497 = vadd.f32 %v477, %v486
        %v498 = vadd.f32 %v478, %v490
        %v499 = vadd.f32 %v479, %v486
        %v500 = vadd.f32 %v480, %v490
        %v501 = vtanh.pop %v493
        %v502 = vtanh.pop %v494
        %v503 = vtanh.pop %v495
        %v504 = vtanh.pop %v496
        %v505 = vtanh.pop %v497
        %v506 = vtanh.pop %v498
        %v507 = vtanh.pop %v499
        %v508 = vtanh.pop %v500
        %v509 = vpack.c.bf16 %v503, %v501
        %v510 = vpack.c.bf16 %v504, %v502
        %v511 = vpack.c.bf16 %v507, %v505
        %v512 = vpack.c.bf16 %v508, %v506
        %v513 = vld [vmem:[#allocation2] sm:$0xff]
        %v514 = vld [vmem:[#allocation2 + $0x8] sm:$0xff]
        %v515 = vld [vmem:[#allocation2 + $0x10] sm:$0xff]
        %v516 = vld [vmem:[#allocation2 + $0x18] sm:$0xff]
        %v517 = vld [vmem:[#allocation2 + $0x20] sm:$0xff]
        %v518 = vld [vmem:[#allocation2 + $0x28] sm:$0xff]
        %v519 = vld [vmem:[#allocation2 + $0x30] sm:$0xff]
        %v520 = vld [vmem:[#allocation2 + $0x38] sm:$0xff]
        %v521 = vld [vmem:[#allocation2 + $0x40] sm:$0xff]
        %v522 = vld [vmem:[#allocation2 + $0x48] sm:$0xff]
        %v523 = vld [vmem:[#allocation2 + $0x50] sm:$0xff]
        %v524 = vld [vmem:[#allocation2 + $0x58] sm:$0xff]
        %v525 = vld [vmem:[#allocation2 + $0x60] sm:$0xff]
        %v526 = vld [vmem:[#allocation2 + $0x68] sm:$0xff]
        %v527 = vld [vmem:[#allocation2 + $0x70] sm:$0xff]
        %v528 = vld [vmem:[#allocation2 + $0x78] sm:$0xff]
        %v529 = vld [vmem:[#allocation2 + $0x80] sm:$0xff]
        %v530 = vld [vmem:[#allocation2 + $0x88] sm:$0xff]
        %v531 = vld [vmem:[#allocation2 + $0x90] sm:$0xff]
        %v532 = vld [vmem:[#allocation2 + $0x98] sm:$0xff]
        %v533 = vld [vmem:[#allocation2 + $0xa0] sm:$0xff]
        %v534 = vld [vmem:[#allocation2 + $0xa8] sm:$0xff]
        %v535 = vld [vmem:[#allocation2 + $0xb0] sm:$0xff]
        %v536 = vld [vmem:[#allocation2 + $0xb8] sm:$0xff]
        %v537 = vld [vmem:[#allocation2 + $0xc0] sm:$0xff]
        %v538 = vld [vmem:[#allocation2 + $0xc8] sm:$0xff]
        %v539 = vld [vmem:[#allocation2 + $0xd0] sm:$0xff]
        %v540 = vld [vmem:[#allocation2 + $0xd8] sm:$0xff]
        %v541 = vld [vmem:[#allocation2 + $0xe0] sm:$0xff]
        %v542 = vld [vmem:[#allocation2 + $0xe8] sm:$0xff]
        %v543 = vld [vmem:[#allocation2 + $0xf0] sm:$0xff]
        %v544 = vld [vmem:[#allocation2 + $0xf8] sm:$0xff]
        %v545 = vld [vmem:[%s4] sm:$0x3]
        %v547 = vlaneseq
        %v548 = vshrl.u32 %v547, 7
        %v549 = vsub.s32 0, %v548
        %v550 = vrot.slane %v545, %v549
        %v551 = vlaneseq
        %v552 = vshrl.u32 %v551, 7
        %v553 = vsub.s32 1, %v552
        %v554 = vrot.slane %v545, %v553
        %v589 = vunpack.c.l.b16 %v513
        %v590 = vunpack.c.h.b16 %v513
        %v591 = vunpack.c.l.b16 %v514
        %v592 = vunpack.c.h.b16 %v514
        %v593 = vunpack.c.l.b16 %v515
        %v594 = vunpack.c.h.b16 %v515
        %v595 = vunpack.c.l.b16 %v516
        %v596 = vunpack.c.h.b16 %v516
        %v597 = vunpack.c.l.b16 %v517
        %v598 = vunpack.c.h.b16 %v517
        %v599 = vunpack.c.l.b16 %v518
        %v600 = vunpack.c.h.b16 %v518
        %v601 = vunpack.c.l.b16 %v519
        %v602 = vunpack.c.h.b16 %v519
        %v603 = vunpack.c.l.b16 %v520
        %v604 = vunpack.c.h.b16 %v520
        %v605 = vunpack.c.l.b16 %v521
        %v606 = vunpack.c.h.b16 %v521
        %v607 = vunpack.c.l.b16 %v522
        %v608 = vunpack.c.h.b16 %v522
        %v609 = vunpack.c.l.b16 %v523
        %v610 = vunpack.c.h.b16 %v523
        %v611 = vunpack.c.l.b16 %v524
        %v612 = vunpack.c.h.b16 %v524
        %v613 = vunpack.c.l.b16 %v525
        %v614 = vunpack.c.h.b16 %v525
        %v615 = vunpack.c.l.b16 %v526
        %v616 = vunpack.c.h.b16 %v526
        %v617 = vunpack.c.l.b16 %v527
        %v618 = vunpack.c.h.b16 %v527
        %v619 = vunpack.c.l.b16 %v528
        %v620 = vunpack.c.h.b16 %v528
        %v621 = vunpack.c.l.b16 %v529
        %v622 = vunpack.c.h.b16 %v529
        %v623 = vunpack.c.l.b16 %v530
        %v624 = vunpack.c.h.b16 %v530
        %v625 = vunpack.c.l.b16 %v531
        %v626 = vunpack.c.h.b16 %v531
        %v627 = vunpack.c.l.b16 %v532
        %v628 = vunpack.c.h.b16 %v532
        %v629 = vunpack.c.l.b16 %v533
        %v630 = vunpack.c.h.b16 %v533
        %v631 = vunpack.c.l.b16 %v534
        %v632 = vunpack.c.h.b16 %v534
        %v633 = vunpack.c.l.b16 %v535
        %v634 = vunpack.c.h.b16 %v535
        %v635 = vunpack.c.l.b16 %v536
        %v636 = vunpack.c.h.b16 %v536
        %v637 = vunpack.c.l.b16 %v537
        %v638 = vunpack.c.h.b16 %v537
        %v639 = vunpack.c.l.b16 %v538
        %v640 = vunpack.c.h.b16 %v538
        %v641 = vunpack.c.l.b16 %v539
        %v642 = vunpack.c.h.b16 %v539
        %v643 = vunpack.c.l.b16 %v540
        %v644 = vunpack.c.h.b16 %v540
        %v645 = vunpack.c.l.b16 %v541
        %v646 = vunpack.c.h.b16 %v541
        %v647 = vunpack.c.l.b16 %v542
        %v648 = vunpack.c.h.b16 %v542
        %v649 = vunpack.c.l.b16 %v543
        %v650 = vunpack.c.h.b16 %v543
        %v651 = vunpack.c.l.b16 %v544
        %v652 = vunpack.c.h.b16 %v544
        %v653 = vpack.c.b16 %v591, %v589
        %v654 = vpack.c.b16 %v592, %v590
        %v655 = vpack.c.b16 %v595, %v593
        %v656 = vpack.c.b16 %v596, %v594
        %v657 = vpack.c.b16 %v599, %v597
        %v658 = vpack.c.b16 %v600, %v598
        %v659 = vpack.c.b16 %v603, %v601
        %v660 = vpack.c.b16 %v604, %v602
        %v661 = vpack.c.b16 %v607, %v605
        %v662 = vpack.c.b16 %v608, %v606
        %v663 = vpack.c.b16 %v611, %v609
        %v664 = vpack.c.b16 %v612, %v610
        %v665 = vpack.c.b16 %v615, %v613
        %v666 = vpack.c.b16 %v616, %v614
        %v667 = vpack.c.b16 %v619, %v617
        %v668 = vpack.c.b16 %v620, %v618
        %v669 = vpack.c.b16 %v623, %v621
        %v670 = vpack.c.b16 %v624, %v622
        %v671 = vpack.c.b16 %v627, %v625
        %v672 = vpack.c.b16 %v628, %v626
        %v673 = vpack.c.b16 %v631, %v629
        %v674 = vpack.c.b16 %v632, %v630
        %v675 = vpack.c.b16 %v635, %v633
        %v676 = vpack.c.b16 %v636, %v634
        %v677 = vpack.c.b16 %v639, %v637
        %v678 = vpack.c.b16 %v640, %v638
        %v679 = vpack.c.b16 %v643, %v641
        %v680 = vpack.c.b16 %v644, %v642
        %v681 = vpack.c.b16 %v647, %v645
        %v682 = vpack.c.b16 %v648, %v646
        %v683 = vpack.c.b16 %v651, %v649
        %v684 = vpack.c.b16 %v652, %v650
        %717 = vmatprep.subr.bf16.mxu0 %v654
        %718 = vmatpush1.bf16.msra.mxu0 %v653
        %719 = vmatprep.subr.bf16.mxu0 %v656
        %720 = vmatpush1.bf16.msra.mxu0 %v655
        %721 = vmatprep.subr.bf16.mxu0 %v658
        %722 = vmatpush1.bf16.msra.mxu0 %v657
        %723 = vmatprep.subr.bf16.mxu0 %v660
        %724 = vmatpush1.bf16.msra.mxu0 %v659
        %725 = vmatprep.subr.bf16.mxu0 %v662
        %726 = vmatpush1.bf16.msra.mxu0 %v661
        %727 = vmatprep.subr.bf16.mxu0 %v664
        %728 = vmatpush1.bf16.msra.mxu0 %v663
        %729 = vmatprep.subr.bf16.mxu0 %v666
        %730 = vmatpush1.bf16.msra.mxu0 %v665
        %731 = vmatprep.subr.bf16.mxu0 %v668
        %732 = vmatpush1.bf16.msra.mxu0 %v667
        %733 = vmatprep.subr.bf16.mxu0 %v670
        %734 = vmatpush1.bf16.msra.mxu0 %v669
        %735 = vmatprep.subr.bf16.mxu0 %v672
        %736 = vmatpush1.bf16.msra.mxu0 %v671
        %737 = vmatprep.subr.bf16.mxu0 %v674
        %738 = vmatpush1.bf16.msra.mxu0 %v673
        %739 = vmatprep.subr.bf16.mxu0 %v676
        %740 = vmatpush1.bf16.msra.mxu0 %v675
        %741 = vmatprep.subr.bf16.mxu0 %v678
        %742 = vmatpush1.bf16.msra.mxu0 %v677
        %743 = vmatprep.subr.bf16.mxu0 %v680
        %744 = vmatpush1.bf16.msra.mxu0 %v679
        %745 = vmatprep.subr.bf16.mxu0 %v682
        %746 = vmatpush1.bf16.msra.mxu0 %v681
        %747 = vmatprep.subr.bf16.mxu0 %v684
        %748 = vmatpush1.bf16.msra.mxu0 %v683
        %749 = vmatprep.mubr.bf16.mxu0 %v510
        %750 = vmatmul.mubr.bf16.gmra.mrb[0].mxu0 %v509
        %v751 = vpop.f32.mrb[0].mxu0
        %v752 = vadd.f32 %v550, %v751
        %v753 = vpop.f32.mrb[0].mxu0
        %v754 = vadd.f32 %v554, %v753
        %v755 = vpop.f32.mrb[0].mxu0
        %v756 = vadd.f32 %v550, %v755
        %v757 = vpop.f32.mrb[0].mxu0
        %v758 = vadd.f32 %v554, %v757
        %759 = vmatprep.mubr.bf16.mxu0 %v512
        %760 = vmatmul.mubr.bf16.gmra.mrb[0].mxu0 %v511
        %v761 = vpop.f32.mrb[0].mxu0
        %v762 = vadd.f32 %v550, %v761
        %v763 = vpop.f32.mrb[0].mxu0
        %v764 = vadd.f32 %v554, %v763
        %v765 = vpop.f32.mrb[0].mxu0
        %v766 = vadd.f32 %v550, %v765
        %v767 = vpop.f32.mrb[0].mxu0
        %v768 = vadd.f32 %v554, %v767
        %769 = vdwg.mxu0
        %v770 = vtanh.pop %v752
        %v771 = vtanh.pop %v754
        %v772 = vtanh.pop %v756
        %v773 = vtanh.pop %v758
        %v774 = vtanh.pop %v762
        %v775 = vtanh.pop %v764
        %v776 = vtanh.pop %v766
        %v777 = vtanh.pop %v768
        %v778 = vpack.c.bf16 %v772, %v770
        %v779 = vpack.c.bf16 %v773, %v771
        %v780 = vpack.c.bf16 %v776, %v774
        %v781 = vpack.c.bf16 %v777, %v775
        %v782 = vld [vmem:[#allocation5] sm:$0xff]
        %v783 = vld [vmem:[#allocation5 + $0x8] sm:$0xff]
        %v784 = vld [vmem:[#allocation5 + $0x10] sm:$0xff]
        %v785 = vld [vmem:[#allocation5 + $0x18] sm:$0xff]
        %v786 = vld [vmem:[#allocation5 + $0x20] sm:$0xff]
        %v787 = vld [vmem:[#allocation5 + $0x28] sm:$0xff]
        %v788 = vld [vmem:[#allocation5 + $0x30] sm:$0xff]
        %v789 = vld [vmem:[#allocation5 + $0x38] sm:$0xff]
        %v790 = vld [vmem:[#allocation5 + $0x40] sm:$0xff]
        %v791 = vld [vmem:[#allocation5 + $0x48] sm:$0xff]
        %v792 = vld [vmem:[#allocation5 + $0x50] sm:$0xff]
        %v793 = vld [vmem:[#allocation5 + $0x58] sm:$0xff]
        %v794 = vld [vmem:[#allocation5 + $0x60] sm:$0xff]
        %v795 = vld [vmem:[#allocation5 + $0x68] sm:$0xff]
        %v796 = vld [vmem:[#allocation5 + $0x70] sm:$0xff]
        %v797 = vld [vmem:[#allocation5 + $0x78] sm:$0xff]
        %v798 = vld [vmem:[#allocation5 + $0x80] sm:$0xff]
        %v799 = vld [vmem:[#allocation5 + $0x88] sm:$0xff]
        %v800 = vld [vmem:[#allocation5 + $0x90] sm:$0xff]
        %v801 = vld [vmem:[#allocation5 + $0x98] sm:$0xff]
        %v802 = vld [vmem:[#allocation5 + $0xa0] sm:$0xff]
        %v803 = vld [vmem:[#allocation5 + $0xa8] sm:$0xff]
        %v804 = vld [vmem:[#allocation5 + $0xb0] sm:$0xff]
        %v805 = vld [vmem:[#allocation5 + $0xb8] sm:$0xff]
        %v806 = vld [vmem:[#allocation5 + $0xc0] sm:$0xff]
        %v807 = vld [vmem:[#allocation5 + $0xc8] sm:$0xff]
        %v808 = vld [vmem:[#allocation5 + $0xd0] sm:$0xff]
        %v809 = vld [vmem:[#allocation5 + $0xd8] sm:$0xff]
        %v810 = vld [vmem:[#allocation5 + $0xe0] sm:$0xff]
        %v811 = vld [vmem:[#allocation5 + $0xe8] sm:$0xff]
        %v812 = vld [vmem:[#allocation5 + $0xf0] sm:$0xff]
        %v813 = vld [vmem:[#allocation5 + $0xf8] sm:$0xff]
        %v814 = vld [vmem:[%s6] sm:$0x3]
        %v816 = vlaneseq
        %v817 = vshrl.u32 %v816, 7
        %v818 = vsub.s32 0, %v817
        %v819 = vrot.slane %v814, %v818
        %v820 = vlaneseq
        %v821 = vshrl.u32 %v820, 7
        %v822 = vsub.s32 1, %v821
        %v823 = vrot.slane %v814, %v822
        %v858 = vunpack.c.l.b16 %v782
        %v859 = vunpack.c.h.b16 %v782
        %v860 = vunpack.c.l.b16 %v783
        %v861 = vunpack.c.h.b16 %v783
        %v862 = vunpack.c.l.b16 %v784
        %v863 = vunpack.c.h.b16 %v784
        %v864 = vunpack.c.l.b16 %v785
        %v865 = vunpack.c.h.b16 %v785
        %v866 = vunpack.c.l.b16 %v786
        %v867 = vunpack.c.h.b16 %v786
        %v868 = vunpack.c.l.b16 %v787
        %v869 = vunpack.c.h.b16 %v787
        %v870 = vunpack.c.l.b16 %v788
        %v871 = vunpack.c.h.b16 %v788
        %v872 = vunpack.c.l.b16 %v789
        %v873 = vunpack.c.h.b16 %v789
        %v874 = vunpack.c.l.b16 %v790
        %v875 = vunpack.c.h.b16 %v790
        %v876 = vunpack.c.l.b16 %v791
        %v877 = vunpack.c.h.b16 %v791
        %v878 = vunpack.c.l.b16 %v792
        %v879 = vunpack.c.h.b16 %v792
        %v880 = vunpack.c.l.b16 %v793
        %v881 = vunpack.c.h.b16 %v793
        %v882 = vunpack.c.l.b16 %v794
        %v883 = vunpack.c.h.b16 %v794
        %v884 = vunpack.c.l.b16 %v795
        %v885 = vunpack.c.h.b16 %v795
        %v886 = vunpack.c.l.b16 %v796
        %v887 = vunpack.c.h.b16 %v796
        %v888 = vunpack.c.l.b16 %v797
        %v889 = vunpack.c.h.b16 %v797
        %v890 = vunpack.c.l.b16 %v798
        %v891 = vunpack.c.h.b16 %v798
        %v892 = vunpack.c.l.b16 %v799
        %v893 = vunpack.c.h.b16 %v799
        %v894 = vunpack.c.l.b16 %v800
        %v895 = vunpack.c.h.b16 %v800
        %v896 = vunpack.c.l.b16 %v801
        %v897 = vunpack.c.h.b16 %v801
        %v898 = vunpack.c.l.b16 %v802
        %v899 = vunpack.c.h.b16 %v802
        %v900 = vunpack.c.l.b16 %v803
        %v901 = vunpack.c.h.b16 %v803
        %v902 = vunpack.c.l.b16 %v804
        %v903 = vunpack.c.h.b16 %v804
        %v904 = vunpack.c.l.b16 %v805
        %v905 = vunpack.c.h.b16 %v805
        %v906 = vunpack.c.l.b16 %v806
        %v907 = vunpack.c.h.b16 %v806
        %v908 = vunpack.c.l.b16 %v807
        %v909 = vunpack.c.h.b16 %v807
        %v910 = vunpack.c.l.b16 %v808
        %v911 = vunpack.c.h.b16 %v808
        %v912 = vunpack.c.l.b16 %v809
        %v913 = vunpack.c.h.b16 %v809
        %v914 = vunpack.c.l.b16 %v810
        %v915 = vunpack.c.h.b16 %v810
        %v916 = vunpack.c.l.b16 %v811
        %v917 = vunpack.c.h.b16 %v811
        %v918 = vunpack.c.l.b16 %v812
        %v919 = vunpack.c.h.b16 %v812
        %v920 = vunpack.c.l.b16 %v813
        %v921 = vunpack.c.h.b16 %v813
        %v922 = vpack.c.b16 %v860, %v858
        %v923 = vpack.c.b16 %v861, %v859
        %v924 = vpack.c.b16 %v864, %v862
        %v925 = vpack.c.b16 %v865, %v863
        %v926 = vpack.c.b16 %v868, %v866
        %v927 = vpack.c.b16 %v869, %v867
        %v928 = vpack.c.b16 %v872, %v870
        %v929 = vpack.c.b16 %v873, %v871
        %v930 = vpack.c.b16 %v876, %v874
        %v931 = vpack.c.b16 %v877, %v875
        %v932 = vpack.c.b16 %v880, %v878
        %v933 = vpack.c.b16 %v881, %v879
        %v934 = vpack.c.b16 %v884, %v882
        %v935 = vpack.c.b16 %v885, %v883
        %v936 = vpack.c.b16 %v888, %v886
        %v937 = vpack.c.b16 %v889, %v887
        %v938 = vpack.c.b16 %v892, %v890
        %v939 = vpack.c.b16 %v893, %v891
        %v940 = vpack.c.b16 %v896, %v894
        %v941 = vpack.c.b16 %v897, %v895
        %v942 = vpack.c.b16 %v900, %v898
        %v943 = vpack.c.b16 %v901, %v899
        %v944 = vpack.c.b16 %v904, %v902
        %v945 = vpack.c.b16 %v905, %v903
        %v946 = vpack.c.b16 %v908, %v906
        %v947 = vpack.c.b16 %v909, %v907
        %v948 = vpack.c.b16 %v912, %v910
        %v949 = vpack.c.b16 %v913, %v911
        %v950 = vpack.c.b16 %v916, %v914
        %v951 = vpack.c.b16 %v917, %v915
        %v952 = vpack.c.b16 %v920, %v918
        %v953 = vpack.c.b16 %v921, %v919
        %986 = vmatprep.subr.bf16.mxu0 %v923
        %987 = vmatpush1.bf16.msra.mxu0 %v922
        %988 = vmatprep.subr.bf16.mxu0 %v925
        %989 = vmatpush1.bf16.msra.mxu0 %v924
        %990 = vmatprep.subr.bf16.mxu0 %v927
        %991 = vmatpush1.bf16.msra.mxu0 %v926
        %992 = vmatprep.subr.bf16.mxu0 %v929
        %993 = vmatpush1.bf16.msra.mxu0 %v928
        %994 = vmatprep.subr.bf16.mxu0 %v931
        %995 = vmatpush1.bf16.msra.mxu0 %v930
        %996 = vmatprep.subr.bf16.mxu0 %v933
        %997 = vmatpush1.bf16.msra.mxu0 %v932
        %998 = vmatprep.subr.bf16.mxu0 %v935
        %999 = vmatpush1.bf16.msra.mxu0 %v934
        %1000 = vmatprep.subr.bf16.mxu0 %v937
        %1001 = vmatpush1.bf16.msra.mxu0 %v936
        %1002 = vmatprep.subr.bf16.mxu0 %v939
        %1003 = vmatpush1.bf16.msra.mxu0 %v938
        %1004 = vmatprep.subr.bf16.mxu0 %v941
        %1005 = vmatpush1.bf16.msra.mxu0 %v940
        %1006 = vmatprep.subr.bf16.mxu0 %v943
        %1007 = vmatpush1.bf16.msra.mxu0 %v942
        %1008 = vmatprep.subr.bf16.mxu0 %v945
        %1009 = vmatpush1.bf16.msra.mxu0 %v944
        %1010 = vmatprep.subr.bf16.mxu0 %v947
        %1011 = vmatpush1.bf16.msra.mxu0 %v946
        %1012 = vmatprep.subr.bf16.mxu0 %v949
        %1013 = vmatpush1.bf16.msra.mxu0 %v948
        %1014 = vmatprep.subr.bf16.mxu0 %v951
        %1015 = vmatpush1.bf16.msra.mxu0 %v950
        %1016 = vmatprep.subr.bf16.mxu0 %v953
        %1017 = vmatpush1.bf16.msra.mxu0 %v952
        %1018 = vmatprep.mubr.bf16.mxu0 %v779
        %1019 = vmatmul.mubr.bf16.gmra.mrb[0].mxu0 %v778
        %v1020 = vpop.f32.mrb[0].mxu0
        %v1021 = vadd.f32 %v819, %v1020
        %v1022 = vpop.f32.mrb[0].mxu0
        %v1023 = vadd.f32 %v823, %v1022
        %v1024 = vpop.f32.mrb[0].mxu0
        %v1025 = vadd.f32 %v819, %v1024
        %v1026 = vpop.f32.mrb[0].mxu0
        %v1027 = vadd.f32 %v823, %v1026
        %1028 = vmatprep.mubr.bf16.mxu0 %v781
        %1029 = vmatmul.mubr.bf16.gmra.mrb[0].mxu0 %v780
        %v1030 = vpop.f32.mrb[0].mxu0
        %v1031 = vadd.f32 %v819, %v1030
        %v1032 = vpop.f32.mrb[0].mxu0
        %v1033 = vadd.f32 %v823, %v1032
        %v1034 = vpop.f32.mrb[0].mxu0
        %v1035 = vadd.f32 %v819, %v1034
        %v1036 = vpop.f32.mrb[0].mxu0
        %v1037 = vadd.f32 %v823, %v1036
        %1038 = vdwg.mxu0
        %v1039 = vadd.f32 %v1021, %v501
        %v1040 = vadd.f32 %v1023, %v502
        %v1041 = vadd.f32 %v1025, %v503
        %v1042 = vadd.f32 %v1027, %v504
        %v1043 = vadd.f32 %v1031, %v505
        %v1044 = vadd.f32 %v1033, %v506
        %v1045 = vadd.f32 %v1035, %v507
        %v1046 = vadd.f32 %v1037, %v508
        %v1047 = vpack.c.bf16 %v1041, %v1039
        %v1048 = vpack.c.bf16 %v1042, %v1040
        %v1049 = vpack.c.bf16 %v1045, %v1043
        %v1050 = vpack.c.bf16 %v1046, %v1044
        %s1051 = scalar_lea.vmem [#allocation2], 256
        %v1052 = vld [vmem:[%s1051] sm:$0xff]
        %v1053 = vld [vmem:[%s1051 + $0x8] sm:$0xff]
        %v1054 = vld [vmem:[%s1051 + $0x10] sm:$0xff]
        %v1055 = vld [vmem:[%s1051 + $0x18] sm:$0xff]
        %v1056 = vld [vmem:[%s1051 + $0x20] sm:$0xff]
        %v1057 = vld [vmem:[%s1051 + $0x28] sm:$0xff]
        %v1058 = vld [vmem:[%s1051 + $0x30] sm:$0xff]
        %v1059 = vld [vmem:[%s1051 + $0x38] sm:$0xff]
        %v1060 = vld [vmem:[%s1051 + $0x40] sm:$0xff]
        %v1061 = vld [vmem:[%s1051 + $0x48] sm:$0xff]
        %v1062 = vld [vmem:[%s1051 + $0x50] sm:$0xff]
        %v1063 = vld [vmem:[%s1051 + $0x58] sm:$0xff]
        %v1064 = vld [vmem:[%s1051 + $0x60] sm:$0xff]
        %v1065 = vld [vmem:[%s1051 + $0x68] sm:$0xff]
        %v1066 = vld [vmem:[%s1051 + $0x70] sm:$0xff]
        %v1067 = vld [vmem:[%s1051 + $0x78] sm:$0xff]
        %v1068 = vld [vmem:[%s1051 + $0x80] sm:$0xff]
        %v1069 = vld [vmem:[%s1051 + $0x88] sm:$0xff]
        %v1070 = vld [vmem:[%s1051 + $0x90] sm:$0xff]
        %v1071 = vld [vmem:[%s1051 + $0x98] sm:$0xff]
        %v1072 = vld [vmem:[%s1051 + $0xa0] sm:$0xff]
        %v1073 = vld [vmem:[%s1051 + $0xa8] sm:$0xff]
        %v1074 = vld [vmem:[%s1051 + $0xb0] sm:$0xff]
        %v1075 = vld [vmem:[%s1051 + $0xb8] sm:$0xff]
        %v1076 = vld [vmem:[%s1051 + $0xc0] sm:$0xff]
        %v1077 = vld [vmem:[%s1051 + $0xc8] sm:$0xff]
        %v1078 = vld [vmem:[%s1051 + $0xd0] sm:$0xff]
        %v1079 = vld [vmem:[%s1051 + $0xd8] sm:$0xff]
        %v1080 = vld [vmem:[%s1051 + $0xe0] sm:$0xff]
        %v1081 = vld [vmem:[%s1051 + $0xe8] sm:$0xff]
        %v1082 = vld [vmem:[%s1051 + $0xf0] sm:$0xff]
        %v1083 = vld [vmem:[%s1051 + $0xf8] sm:$0xff]
        %s1084 = scalar_lea.vmem %s4, 2
        %v1085 = vld [vmem:[%s1084] sm:$0x3]
        %v1087 = vlaneseq
        %v1088 = vshrl.u32 %v1087, 7
        %v1089 = vsub.s32 0, %v1088
        %v1090 = vrot.slane %v1085, %v1089
        %v1091 = vlaneseq
        %v1092 = vshrl.u32 %v1091, 7
        %v1093 = vsub.s32 1, %v1092
        %v1094 = vrot.slane %v1085, %v1093
        %v1129 = vunpack.c.l.b16 %v1052
        %v1130 = vunpack.c.h.b16 %v1052
        %v1131 = vunpack.c.l.b16 %v1053
        %v1132 = vunpack.c.h.b16 %v1053
        %v1133 = vunpack.c.l.b16 %v1054
        %v1134 = vunpack.c.h.b16 %v1054
        %v1135 = vunpack.c.l.b16 %v1055
        %v1136 = vunpack.c.h.b16 %v1055
        %v1137 = vunpack.c.l.b16 %v1056
        %v1138 = vunpack.c.h.b16 %v1056
        %v1139 = vunpack.c.l.b16 %v1057
        %v1140 = vunpack.c.h.b16 %v1057
        %v1141 = vunpack.c.l.b16 %v1058
        %v1142 = vunpack.c.h.b16 %v1058
        %v1143 = vunpack.c.l.b16 %v1059
        %v1144 = vunpack.c.h.b16 %v1059
        %v1145 = vunpack.c.l.b16 %v1060
        %v1146 = vunpack.c.h.b16 %v1060
        %v1147 = vunpack.c.l.b16 %v1061
        %v1148 = vunpack.c.h.b16 %v1061
        %v1149 = vunpack.c.l.b16 %v1062
        %v1150 = vunpack.c.h.b16 %v1062
        %v1151 = vunpack.c.l.b16 %v1063
        %v1152 = vunpack.c.h.b16 %v1063
        %v1153 = vunpack.c.l.b16 %v1064
        %v1154 = vunpack.c.h.b16 %v1064
        %v1155 = vunpack.c.l.b16 %v1065
        %v1156 = vunpack.c.h.b16 %v1065
        %v1157 = vunpack.c.l.b16 %v1066
        %v1158 = vunpack.c.h.b16 %v1066
        %v1159 = vunpack.c.l.b16 %v1067
        %v1160 = vunpack.c.h.b16 %v1067
        %v1161 = vunpack.c.l.b16 %v1068
        %v1162 = vunpack.c.h.b16 %v1068
        %v1163 = vunpack.c.l.b16 %v1069
        %v1164 = vunpack.c.h.b16 %v1069
        %v1165 = vunpack.c.l.b16 %v1070
        %v1166 = vunpack.c.h.b16 %v1070
        %v1167 = vunpack.c.l.b16 %v1071
        %v1168 = vunpack.c.h.b16 %v1071
        %v1169 = vunpack.c.l.b16 %v1072
        %v1170 = vunpack.c.h.b16 %v1072
        %v1171 = vunpack.c.l.b16 %v1073
        %v1172 = vunpack.c.h.b16 %v1073
        %v1173 = vunpack.c.l.b16 %v1074
        %v1174 = vunpack.c.h.b16 %v1074
        %v1175 = vunpack.c.l.b16 %v1075
        %v1176 = vunpack.c.h.b16 %v1075
        %v1177 = vunpack.c.l.b16 %v1076
        %v1178 = vunpack.c.h.b16 %v1076
        %v1179 = vunpack.c.l.b16 %v1077
        %v1180 = vunpack.c.h.b16 %v1077
        %v1181 = vunpack.c.l.b16 %v1078
        %v1182 = vunpack.c.h.b16 %v1078
        %v1183 = vunpack.c.l.b16 %v1079
        %v1184 = vunpack.c.h.b16 %v1079
        %v1185 = vunpack.c.l.b16 %v1080
        %v1186 = vunpack.c.h.b16 %v1080
        %v1187 = vunpack.c.l.b16 %v1081
        %v1188 = vunpack.c.h.b16 %v1081
        %v1189 = vunpack.c.l.b16 %v1082
        %v1190 = vunpack.c.h.b16 %v1082
        %v1191 = vunpack.c.l.b16 %v1083
        %v1192 = vunpack.c.h.b16 %v1083
        %v1193 = vpack.c.b16 %v1131, %v1129
        %v1194 = vpack.c.b16 %v1132, %v1130
        %v1195 = vpack.c.b16 %v1135, %v1133
        %v1196 = vpack.c.b16 %v1136, %v1134
        %v1197 = vpack.c.b16 %v1139, %v1137
        %v1198 = vpack.c.b16 %v1140, %v1138
        %v1199 = vpack.c.b16 %v1143, %v1141
        %v1200 = vpack.c.b16 %v1144, %v1142
        %v1201 = vpack.c.b16 %v1147, %v1145
        %v1202 = vpack.c.b16 %v1148, %v1146
        %v1203 = vpack.c.b16 %v1151, %v1149
        %v1204 = vpack.c.b16 %v1152, %v1150
        %v1205 = vpack.c.b16 %v1155, %v1153
        %v1206 = vpack.c.b16 %v1156, %v1154
        %v1207 = vpack.c.b16 %v1159, %v1157
        %v1208 = vpack.c.b16 %v1160, %v1158
        %v1209 = vpack.c.b16 %v1163, %v1161
        %v1210 = vpack.c.b16 %v1164, %v1162
        %v1211 = vpack.c.b16 %v1167, %v1165
        %v1212 = vpack.c.b16 %v1168, %v1166
        %v1213 = vpack.c.b16 %v1171, %v1169
        %v1214 = vpack.c.b16 %v1172, %v1170
        %v1215 = vpack.c.b16 %v1175, %v1173
        %v1216 = vpack.c.b16 %v1176, %v1174
        %v1217 = vpack.c.b16 %v1179, %v1177
        %v1218 = vpack.c.b16 %v1180, %v1178
        %v1219 = vpack.c.b16 %v1183, %v1181
        %v1220 = vpack.c.b16 %v1184, %v1182
        %v1221 = vpack.c.b16 %v1187, %v1185
        %v1222 = vpack.c.b16 %v1188, %v1186
        %v1223 = vpack.c.b16 %v1191, %v1189
        %v1224 = vpack.c.b16 %v1192, %v1190
        %1257 = vmatprep.subr.bf16.mxu0 %v1194
        %1258 = vmatpush1.bf16.msra.mxu0 %v1193
        %1259 = vmatprep.subr.bf16.mxu0 %v1196
        %1260 = vmatpush1.bf16.msra.mxu0 %v1195
        %1261 = vmatprep.subr.bf16.mxu0 %v1198
        %1262 = vmatpush1.bf16.msra.mxu0 %v1197
        %1263 = vmatprep.subr.bf16.mxu0 %v1200
        %1264 = vmatpush1.bf16.msra.mxu0 %v1199
        %1265 = vmatprep.subr.bf16.mxu0 %v1202
        %1266 = vmatpush1.bf16.msra.mxu0 %v1201
        %1267 = vmatprep.subr.bf16.mxu0 %v1204
        %1268 = vmatpush1.bf16.msra.mxu0 %v1203
        %1269 = vmatprep.subr.bf16.mxu0 %v1206
        %1270 = vmatpush1.bf16.msra.mxu0 %v1205
        %1271 = vmatprep.subr.bf16.mxu0 %v1208
        %1272 = vmatpush1.bf16.msra.mxu0 %v1207
        %1273 = vmatprep.subr.bf16.mxu0 %v1210
        %1274 = vmatpush1.bf16.msra.mxu0 %v1209
        %1275 = vmatprep.subr.bf16.mxu0 %v1212
        %1276 = vmatpush1.bf16.msra.mxu0 %v1211
        %1277 = vmatprep.subr.bf16.mxu0 %v1214
        %1278 = vmatpush1.bf16.msra.mxu0 %v1213
        %1279 = vmatprep.subr.bf16.mxu0 %v1216
        %1280 = vmatpush1.bf16.msra.mxu0 %v1215
        %1281 = vmatprep.subr.bf16.mxu0 %v1218
        %1282 = vmatpush1.bf16.msra.mxu0 %v1217
        %1283 = vmatprep.subr.bf16.mxu0 %v1220
        %1284 = vmatpush1.bf16.msra.mxu0 %v1219
        %1285 = vmatprep.subr.bf16.mxu0 %v1222
        %1286 = vmatpush1.bf16.msra.mxu0 %v1221
        %1287 = vmatprep.subr.bf16.mxu0 %v1224
        %1288 = vmatpush1.bf16.msra.mxu0 %v1223
        %1289 = vmatprep.mubr.bf16.mxu0 %v1048
        %1290 = vmatmul.mubr.bf16.gmra.mrb[0].mxu0 %v1047
        %v1291 = vpop.f32.mrb[0].mxu0
        %v1292 = vadd.f32 %v1090, %v1291
        %v1293 = vpop.f32.mrb[0].mxu0
        %v1294 = vadd.f32 %v1094, %v1293
        %v1295 = vpop.f32.mrb[0].mxu0
        %v1296 = vadd.f32 %v1090, %v1295
        %v1297 = vpop.f32.mrb[0].mxu0
        %v1298 = vadd.f32 %v1094, %v1297
        %1299 = vmatprep.mubr.bf16.mxu0 %v1050
        %1300 = vmatmul.mubr.bf16.gmra.mrb[0].mxu0 %v1049
        %v1301 = vpop.f32.mrb[0].mxu0
        %v1302 = vadd.f32 %v1090, %v1301
        %v1303 = vpop.f32.mrb[0].mxu0
        %v1304 = vadd.f32 %v1094, %v1303
        %v1305 = vpop.f32.mrb[0].mxu0
        %v1306 = vadd.f32 %v1090, %v1305
        %v1307 = vpop.f32.mrb[0].mxu0
        %v1308 = vadd.f32 %v1094, %v1307
        %1309 = vdwg.mxu0
        %v1310 = vtanh.pop %v1292
        %v1311 = vtanh.pop %v1294
        %v1312 = vtanh.pop %v1296
        %v1313 = vtanh.pop %v1298
        %v1314 = vtanh.pop %v1302
        %v1315 = vtanh.pop %v1304
        %v1316 = vtanh.pop %v1306
        %v1317 = vtanh.pop %v1308
        %v1318 = vpack.c.bf16 %v1312, %v1310
        %v1319 = vpack.c.bf16 %v1313, %v1311
        %v1320 = vpack.c.bf16 %v1316, %v1314
        %v1321 = vpack.c.bf16 %v1317, %v1315
        %s1322 = scalar_lea.vmem [#allocation5], 256
        %v1323 = vld [vmem:[%s1322] sm:$0xff]
        %v1324 = vld [vmem:[%s1322 + $0x8] sm:$0xff]
        %v1325 = vld [vmem:[%s1322 + $0x10] sm:$0xff]
        %v1326 = vld [vmem:[%s1322 + $0x18] sm:$0xff]
        %v1327 = vld [vmem:[%s1322 + $0x20] sm:$0xff]
        %v1328 = vld [vmem:[%s1322 + $0x28] sm:$0xff]
        %v1329 = vld [vmem:[%s1322 + $0x30] sm:$0xff]
        %v1330 = vld [vmem:[%s1322 + $0x38] sm:$0xff]
        %v1331 = vld [vmem:[%s1322 + $0x40] sm:$0xff]
        %v1332 = vld [vmem:[%s1322 + $0x48] sm:$0xff]
        %v1333 = vld [vmem:[%s1322 + $0x50] sm:$0xff]
        %v1334 = vld [vmem:[%s1322 + $0x58] sm:$0xff]
        %v1335 = vld [vmem:[%s1322 + $0x60] sm:$0xff]
        %v1336 = vld [vmem:[%s1322 + $0x68] sm:$0xff]
        %v1337 = vld [vmem:[%s1322 + $0x70] sm:$0xff]
        %v1338 = vld [vmem:[%s1322 + $0x78] sm:$0xff]
        %v1339 = vld [vmem:[%s1322 + $0x80] sm:$0xff]
        %v1340 = vld [vmem:[%s1322 + $0x88] sm:$0xff]
        %v1341 = vld [vmem:[%s1322 + $0x90] sm:$0xff]
        %v1342 = vld [vmem:[%s1322 + $0x98] sm:$0xff]
        %v1343 = vld [vmem:[%s1322 + $0xa0] sm:$0xff]
        %v1344 = vld [vmem:[%s1322 + $0xa8] sm:$0xff]
        %v1345 = vld [vmem:[%s1322 + $0xb0] sm:$0xff]
        %v1346 = vld [vmem:[%s1322 + $0xb8] sm:$0xff]
        %v1347 = vld [vmem:[%s1322 + $0xc0] sm:$0xff]
        %v1348 = vld [vmem:[%s1322 + $0xc8] sm:$0xff]
        %v1349 = vld [vmem:[%s1322 + $0xd0] sm:$0xff]
        %v1350 = vld [vmem:[%s1322 + $0xd8] sm:$0xff]
        %v1351 = vld [vmem:[%s1322 + $0xe0] sm:$0xff]
        %v1352 = vld [vmem:[%s1322 + $0xe8] sm:$0xff]
        %v1353 = vld [vmem:[%s1322 + $0xf0] sm:$0xff]
        %v1354 = vld [vmem:[%s1322 + $0xf8] sm:$0xff]
        %s1355 = scalar_lea.vmem %s6, 2
        %v1356 = vld [vmem:[%s1355] sm:$0x3]
        %v1358 = vlaneseq
        %v1359 = vshrl.u32 %v1358, 7
        %v1360 = vsub.s32 0, %v1359
        %v1361 = vrot.slane %v1356, %v1360
        %v1362 = vlaneseq
        %v1363 = vshrl.u32 %v1362, 7
        %v1364 = vsub.s32 1, %v1363
        %v1365 = vrot.slane %v1356, %v1364
        %v1400 = vunpack.c.l.b16 %v1323
        %v1401 = vunpack.c.h.b16 %v1323
        %v1402 = vunpack.c.l.b16 %v1324
        %v1403 = vunpack.c.h.b16 %v1324
        %v1404 = vunpack.c.l.b16 %v1325
        %v1405 = vunpack.c.h.b16 %v1325
        %v1406 = vunpack.c.l.b16 %v1326
        %v1407 = vunpack.c.h.b16 %v1326
        %v1408 = vunpack.c.l.b16 %v1327
        %v1409 = vunpack.c.h.b16 %v1327
        %v1410 = vunpack.c.l.b16 %v1328
        %v1411 = vunpack.c.h.b16 %v1328
        %v1412 = vunpack.c.l.b16 %v1329
        %v1413 = vunpack.c.h.b16 %v1329
        %v1414 = vunpack.c.l.b16 %v1330
        %v1415 = vunpack.c.h.b16 %v1330
        %v1416 = vunpack.c.l.b16 %v1331
        %v1417 = vunpack.c.h.b16 %v1331
        %v1418 = vunpack.c.l.b16 %v1332
        %v1419 = vunpack.c.h.b16 %v1332
        %v1420 = vunpack.c.l.b16 %v1333
        %v1421 = vunpack.c.h.b16 %v1333
        %v1422 = vunpack.c.l.b16 %v1334
        %v1423 = vunpack.c.h.b16 %v1334
        %v1424 = vunpack.c.l.b16 %v1335
        %v1425 = vunpack.c.h.b16 %v1335
        %v1426 = vunpack.c.l.b16 %v1336
        %v1427 = vunpack.c.h.b16 %v1336
        %v1428 = vunpack.c.l.b16 %v1337
        %v1429 = vunpack.c.h.b16 %v1337
        %v1430 = vunpack.c.l.b16 %v1338
        %v1431 = vunpack.c.h.b16 %v1338
        %v1432 = vunpack.c.l.b16 %v1339
        %v1433 = vunpack.c.h.b16 %v1339
        %v1434 = vunpack.c.l.b16 %v1340
        %v1435 = vunpack.c.h.b16 %v1340
        %v1436 = vunpack.c.l.b16 %v1341
        %v1437 = vunpack.c.h.b16 %v1341
        %v1438 = vunpack.c.l.b16 %v1342
        %v1439 = vunpack.c.h.b16 %v1342
        %v1440 = vunpack.c.l.b16 %v1343
        %v1441 = vunpack.c.h.b16 %v1343
        %v1442 = vunpack.c.l.b16 %v1344
        %v1443 = vunpack.c.h.b16 %v1344
        %v1444 = vunpack.c.l.b16 %v1345
        %v1445 = vunpack.c.h.b16 %v1345
        %v1446 = vunpack.c.l.b16 %v1346
        %v1447 = vunpack.c.h.b16 %v1346
        %v1448 = vunpack.c.l.b16 %v1347
        %v1449 = vunpack.c.h.b16 %v1347
        %v1450 = vunpack.c.l.b16 %v1348
        %v1451 = vunpack.c.h.b16 %v1348
        %v1452 = vunpack.c.l.b16 %v1349
        %v1453 = vunpack.c.h.b16 %v1349
        %v1454 = vunpack.c.l.b16 %v1350
        %v1455 = vunpack.c.h.b16 %v1350
        %v1456 = vunpack.c.l.b16 %v1351
        %v1457 = vunpack.c.h.b16 %v1351
        %v1458 = vunpack.c.l.b16 %v1352
        %v1459 = vunpack.c.h.b16 %v1352
        %v1460 = vunpack.c.l.b16 %v1353
        %v1461 = vunpack.c.h.b16 %v1353
        %v1462 = vunpack.c.l.b16 %v1354
        %v1463 = vunpack.c.h.b16 %v1354
        %v1464 = vpack.c.b16 %v1402, %v1400
        %v1465 = vpack.c.b16 %v1403, %v1401
        %v1466 = vpack.c.b16 %v1406, %v1404
        %v1467 = vpack.c.b16 %v1407, %v1405
        %v1468 = vpack.c.b16 %v1410, %v1408
        %v1469 = vpack.c.b16 %v1411, %v1409
        %v1470 = vpack.c.b16 %v1414, %v1412
        %v1471 = vpack.c.b16 %v1415, %v1413
        %v1472 = vpack.c.b16 %v1418, %v1416
        %v1473 = vpack.c.b16 %v1419, %v1417
        %v1474 = vpack.c.b16 %v1422, %v1420
        %v1475 = vpack.c.b16 %v1423, %v1421
        %v1476 = vpack.c.b16 %v1426, %v1424
        %v1477 = vpack.c.b16 %v1427, %v1425
        %v1478 = vpack.c.b16 %v1430, %v1428
        %v1479 = vpack.c.b16 %v1431, %v1429
        %v1480 = vpack.c.b16 %v1434, %v1432
        %v1481 = vpack.c.b16 %v1435, %v1433
        %v1482 = vpack.c.b16 %v1438, %v1436
        %v1483 = vpack.c.b16 %v1439, %v1437
        %v1484 = vpack.c.b16 %v1442, %v1440
        %v1485 = vpack.c.b16 %v1443, %v1441
        %v1486 = vpack.c.b16 %v1446, %v1444
        %v1487 = vpack.c.b16 %v1447, %v1445
        %v1488 = vpack.c.b16 %v1450, %v1448
        %v1489 = vpack.c.b16 %v1451, %v1449
        %v1490 = vpack.c.b16 %v1454, %v1452
        %v1491 = vpack.c.b16 %v1455, %v1453
        %v1492 = vpack.c.b16 %v1458, %v1456
        %v1493 = vpack.c.b16 %v1459, %v1457
        %v1494 = vpack.c.b16 %v1462, %v1460
        %v1495 = vpack.c.b16 %v1463, %v1461
        %1528 = vmatprep.subr.bf16.mxu0 %v1465
        %1529 = vmatpush1.bf16.msra.mxu0 %v1464
        %1530 = vmatprep.subr.bf16.mxu0 %v1467
        %1531 = vmatpush1.bf16.msra.mxu0 %v1466
        %1532 = vmatprep.subr.bf16.mxu0 %v1469
        %1533 = vmatpush1.bf16.msra.mxu0 %v1468
        %1534 = vmatprep.subr.bf16.mxu0 %v1471
        %1535 = vmatpush1.bf16.msra.mxu0 %v1470
        %1536 = vmatprep.subr.bf16.mxu0 %v1473
        %1537 = vmatpush1.bf16.msra.mxu0 %v1472
        %1538 = vmatprep.subr.bf16.mxu0 %v1475
        %1539 = vmatpush1.bf16.msra.mxu0 %v1474
        %1540 = vmatprep.subr.bf16.mxu0 %v1477
        %1541 = vmatpush1.bf16.msra.mxu0 %v1476
        %1542 = vmatprep.subr.bf16.mxu0 %v1479
        %1543 = vmatpush1.bf16.msra.mxu0 %v1478
        %1544 = vmatprep.subr.bf16.mxu0 %v1481
        %1545 = vmatpush1.bf16.msra.mxu0 %v1480
        %1546 = vmatprep.subr.bf16.mxu0 %v1483
        %1547 = vmatpush1.bf16.msra.mxu0 %v1482
        %1548 = vmatprep.subr.bf16.mxu0 %v1485
        %1549 = vmatpush1.bf16.msra.mxu0 %v1484
        %1550 = vmatprep.subr.bf16.mxu0 %v1487
        %1551 = vmatpush1.bf16.msra.mxu0 %v1486
        %1552 = vmatprep.subr.bf16.mxu0 %v1489
        %1553 = vmatpush1.bf16.msra.mxu0 %v1488
        %1554 = vmatprep.subr.bf16.mxu0 %v1491
        %1555 = vmatpush1.bf16.msra.mxu0 %v1490
        %1556 = vmatprep.subr.bf16.mxu0 %v1493
        %1557 = vmatpush1.bf16.msra.mxu0 %v1492
        %1558 = vmatprep.subr.bf16.mxu0 %v1495
        %1559 = vmatpush1.bf16.msra.mxu0 %v1494
        %1560 = vmatprep.mubr.bf16.mxu0 %v1319
        %1561 = vmatmul.mubr.bf16.gmra.mrb[0].mxu0 %v1318
        %v1562 = vpop.f32.mrb[0].mxu0
        %v1563 = vadd.f32 %v1361, %v1562
        %v1564 = vpop.f32.mrb[0].mxu0
        %v1565 = vadd.f32 %v1365, %v1564
        %v1566 = vpop.f32.mrb[0].mxu0
        %v1567 = vadd.f32 %v1361, %v1566
        %v1568 = vpop.f32.mrb[0].mxu0
        %v1569 = vadd.f32 %v1365, %v1568
        %1570 = vmatprep.mubr.bf16.mxu0 %v1321
        %1571 = vmatmul.mubr.bf16.gmra.mrb[0].mxu0 %v1320
        %v1572 = vpop.f32.mrb[0].mxu0
        %v1573 = vadd.f32 %v1361, %v1572
        %v1574 = vpop.f32.mrb[0].mxu0
        %v1575 = vadd.f32 %v1365, %v1574
        %v1576 = vpop.f32.mrb[0].mxu0
        %v1577 = vadd.f32 %v1361, %v1576
        %v1578 = vpop.f32.mrb[0].mxu0
        %v1579 = vadd.f32 %v1365, %v1578
        %1580 = vdwg.mxu0
        %v1581 = vadd.f32 %v1563, %v1039
        %v1582 = vadd.f32 %v1565, %v1040
        %v1583 = vadd.f32 %v1567, %v1041
        %v1584 = vadd.f32 %v1569, %v1042
        %v1585 = vadd.f32 %v1573, %v1043
        %v1586 = vadd.f32 %v1575, %v1044
        %v1587 = vadd.f32 %v1577, %v1045
        %v1588 = vadd.f32 %v1579, %v1046
        %v1589 = vpack.c.bf16 %v1583, %v1581
        %v1590 = vpack.c.bf16 %v1584, %v1582
        %v1591 = vpack.c.bf16 %v1587, %v1585
        %v1592 = vpack.c.bf16 %v1588, %v1586
        %s1593 = scalar_lea.vmem [#allocation2], 512
        %v1594 = vld [vmem:[%s1593] sm:$0xff]
        %v1595 = vld [vmem:[%s1593 + $0x8] sm:$0xff]
        %v1596 = vld [vmem:[%s1593 + $0x10] sm:$0xff]
        %v1597 = vld [vmem:[%s1593 + $0x18] sm:$0xff]
        %v1598 = vld [vmem:[%s1593 + $0x20] sm:$0xff]
        %v1599 = vld [vmem:[%s1593 + $0x28] sm:$0xff]
        %v1600 = vld [vmem:[%s1593 + $0x30] sm:$0xff]
        %v1601 = vld [vmem:[%s1593 + $0x38] sm:$0xff]
        %v1602 = vld [vmem:[%s1593 + $0x40] sm:$0xff]
        %v1603 = vld [vmem:[%s1593 + $0x48] sm:$0xff]
        %v1604 = vld [vmem:[%s1593 + $0x50] sm:$0xff]
        %v1605 = vld [vmem:[%s1593 + $0x58] sm:$0xff]
        %v1606 = vld [vmem:[%s1593 + $0x60] sm:$0xff]
        %v1607 = vld [vmem:[%s1593 + $0x68] sm:$0xff]
        %v1608 = vld [vmem:[%s1593 + $0x70] sm:$0xff]
        %v1609 = vld [vmem:[%s1593 + $0x78] sm:$0xff]
        %v1610 = vld [vmem:[%s1593 + $0x80] sm:$0xff]
        %v1611 = vld [vmem:[%s1593 + $0x88] sm:$0xff]
        %v1612 = vld [vmem:[%s1593 + $0x90] sm:$0xff]
        %v1613 = vld [vmem:[%s1593 + $0x98] sm:$0xff]
        %v1614 = vld [vmem:[%s1593 + $0xa0] sm:$0xff]
        %v1615 = vld [vmem:[%s1593 + $0xa8] sm:$0xff]
        %v1616 = vld [vmem:[%s1593 + $0xb0] sm:$0xff]
        %v1617 = vld [vmem:[%s1593 + $0xb8] sm:$0xff]
        %v1618 = vld [vmem:[%s1593 + $0xc0] sm:$0xff]
        %v1619 = vld [vmem:[%s1593 + $0xc8] sm:$0xff]
        %v1620 = vld [vmem:[%s1593 + $0xd0] sm:$0xff]
        %v1621 = vld [vmem:[%s1593 + $0xd8] sm:$0xff]
        %v1622 = vld [vmem:[%s1593 + $0xe0] sm:$0xff]
        %v1623 = vld [vmem:[%s1593 + $0xe8] sm:$0xff]
        %v1624 = vld [vmem:[%s1593 + $0xf0] sm:$0xff]
        %v1625 = vld [vmem:[%s1593 + $0xf8] sm:$0xff]
        %s1626 = scalar_lea.vmem %s4, 4
        %v1627 = vld [vmem:[%s1626] sm:$0x3]
        %v1629 = vlaneseq
        %v1630 = vshrl.u32 %v1629, 7
        %v1631 = vsub.s32 0, %v1630
        %v1632 = vrot.slane %v1627, %v1631
        %v1633 = vlaneseq
        %v1634 = vshrl.u32 %v1633, 7
        %v1635 = vsub.s32 1, %v1634
        %v1636 = vrot.slane %v1627, %v1635
        %v1671 = vunpack.c.l.b16 %v1594
        %v1672 = vunpack.c.h.b16 %v1594
        %v1673 = vunpack.c.l.b16 %v1595
        %v1674 = vunpack.c.h.b16 %v1595
        %v1675 = vunpack.c.l.b16 %v1596
        %v1676 = vunpack.c.h.b16 %v1596
        %v1677 = vunpack.c.l.b16 %v1597
        %v1678 = vunpack.c.h.b16 %v1597
        %v1679 = vunpack.c.l.b16 %v1598
        %v1680 = vunpack.c.h.b16 %v1598
        %v1681 = vunpack.c.l.b16 %v1599
        %v1682 = vunpack.c.h.b16 %v1599
        %v1683 = vunpack.c.l.b16 %v1600
        %v1684 = vunpack.c.h.b16 %v1600
        %v1685 = vunpack.c.l.b16 %v1601
        %v1686 = vunpack.c.h.b16 %v1601
        %v1687 = vunpack.c.l.b16 %v1602
        %v1688 = vunpack.c.h.b16 %v1602
        %v1689 = vunpack.c.l.b16 %v1603
        %v1690 = vunpack.c.h.b16 %v1603
        %v1691 = vunpack.c.l.b16 %v1604
        %v1692 = vunpack.c.h.b16 %v1604
        %v1693 = vunpack.c.l.b16 %v1605
        %v1694 = vunpack.c.h.b16 %v1605
        %v1695 = vunpack.c.l.b16 %v1606
        %v1696 = vunpack.c.h.b16 %v1606
        %v1697 = vunpack.c.l.b16 %v1607
        %v1698 = vunpack.c.h.b16 %v1607
        %v1699 = vunpack.c.l.b16 %v1608
        %v1700 = vunpack.c.h.b16 %v1608
        %v1701 = vunpack.c.l.b16 %v1609
        %v1702 = vunpack.c.h.b16 %v1609
        %v1703 = vunpack.c.l.b16 %v1610
        %v1704 = vunpack.c.h.b16 %v1610
        %v1705 = vunpack.c.l.b16 %v1611
        %v1706 = vunpack.c.h.b16 %v1611
        %v1707 = vunpack.c.l.b16 %v1612
        %v1708 = vunpack.c.h.b16 %v1612
        %v1709 = vunpack.c.l.b16 %v1613
        %v1710 = vunpack.c.h.b16 %v1613
        %v1711 = vunpack.c.l.b16 %v1614
        %v1712 = vunpack.c.h.b16 %v1614
        %v1713 = vunpack.c.l.b16 %v1615
        %v1714 = vunpack.c.h.b16 %v1615
        %v1715 = vunpack.c.l.b16 %v1616
        %v1716 = vunpack.c.h.b16 %v1616
        %v1717 = vunpack.c.l.b16 %v1617
        %v1718 = vunpack.c.h.b16 %v1617
        %v1719 = vunpack.c.l.b16 %v1618
        %v1720 = vunpack.c.h.b16 %v1618
        %v1721 = vunpack.c.l.b16 %v1619
        %v1722 = vunpack.c.h.b16 %v1619
        %v1723 = vunpack.c.l.b16 %v1620
        %v1724 = vunpack.c.h.b16 %v1620
        %v1725 = vunpack.c.l.b16 %v1621
        %v1726 = vunpack.c.h.b16 %v1621
        %v1727 = vunpack.c.l.b16 %v1622
        %v1728 = vunpack.c.h.b16 %v1622
        %v1729 = vunpack.c.l.b16 %v1623
        %v1730 = vunpack.c.h.b16 %v1623
        %v1731 = vunpack.c.l.b16 %v1624
        %v1732 = vunpack.c.h.b16 %v1624
        %v1733 = vunpack.c.l.b16 %v1625
        %v1734 = vunpack.c.h.b16 %v1625
        %v1735 = vpack.c.b16 %v1673, %v1671
        %v1736 = vpack.c.b16 %v1674, %v1672
        %v1737 = vpack.c.b16 %v1677, %v1675
        %v1738 = vpack.c.b16 %v1678, %v1676
        %v1739 = vpack.c.b16 %v1681, %v1679
        %v1740 = vpack.c.b16 %v1682, %v1680
        %v1741 = vpack.c.b16 %v1685, %v1683
        %v1742 = vpack.c.b16 %v1686, %v1684
        %v1743 = vpack.c.b16 %v1689, %v1687
        %v1744 = vpack.c.b16 %v1690, %v1688
        %v1745 = vpack.c.b16 %v1693, %v1691
        %v1746 = vpack.c.b16 %v1694, %v1692
        %v1747 = vpack.c.b16 %v1697, %v1695
        %v1748 = vpack.c.b16 %v1698, %v1696
        %v1749 = vpack.c.b16 %v1701, %v1699
        %v1750 = vpack.c.b16 %v1702, %v1700
        %v1751 = vpack.c.b16 %v1705, %v1703
        %v1752 = vpack.c.b16 %v1706, %v1704
        %v1753 = vpack.c.b16 %v1709, %v1707
        %v1754 = vpack.c.b16 %v1710, %v1708
        %v1755 = vpack.c.b16 %v1713, %v1711
        %v1756 = vpack.c.b16 %v1714, %v1712
        %v1757 = vpack.c.b16 %v1717, %v1715
        %v1758 = vpack.c.b16 %v1718, %v1716
        %v1759 = vpack.c.b16 %v1721, %v1719
        %v1760 = vpack.c.b16 %v1722, %v1720
        %v1761 = vpack.c.b16 %v1725, %v1723
        %v1762 = vpack.c.b16 %v1726, %v1724
        %v1763 = vpack.c.b16 %v1729, %v1727
        %v1764 = vpack.c.b16 %v1730, %v1728
        %v1765 = vpack.c.b16 %v1733, %v1731
        %v1766 = vpack.c.b16 %v1734, %v1732
        %1799 = vmatprep.subr.bf16.mxu0 %v1736
        %1800 = vmatpush1.bf16.msra.mxu0 %v1735
        %1801 = vmatprep.subr.bf16.mxu0 %v1738
        %1802 = vmatpush1.bf16.msra.mxu0 %v1737
        %1803 = vmatprep.subr.bf16.mxu0 %v1740
        %1804 = vmatpush1.bf16.msra.mxu0 %v1739
        %1805 = vmatprep.subr.bf16.mxu0 %v1742
        %1806 = vmatpush1.bf16.msra.mxu0 %v1741
        %1807 = vmatprep.subr.bf16.mxu0 %v1744
        %1808 = vmatpush1.bf16.msra.mxu0 %v1743
        %1809 = vmatprep.subr.bf16.mxu0 %v1746
        %1810 = vmatpush1.bf16.msra.mxu0 %v1745
        %1811 = vmatprep.subr.bf16.mxu0 %v1748
        %1812 = vmatpush1.bf16.msra.mxu0 %v1747
        %1813 = vmatprep.subr.bf16.mxu0 %v1750
        %1814 = vmatpush1.bf16.msra.mxu0 %v1749
        %1815 = vmatprep.subr.bf16.mxu0 %v1752
        %1816 = vmatpush1.bf16.msra.mxu0 %v1751
        %1817 = vmatprep.subr.bf16.mxu0 %v1754
        %1818 = vmatpush1.bf16.msra.mxu0 %v1753
        %1819 = vmatprep.subr.bf16.mxu0 %v1756
        %1820 = vmatpush1.bf16.msra.mxu0 %v1755
        %1821 = vmatprep.subr.bf16.mxu0 %v1758
        %1822 = vmatpush1.bf16.msra.mxu0 %v1757
        %1823 = vmatprep.subr.bf16.mxu0 %v1760
        %1824 = vmatpush1.bf16.msra.mxu0 %v1759
        %1825 = vmatprep.subr.bf16.mxu0 %v1762
        %1826 = vmatpush1.bf16.msra.mxu0 %v1761
        %1827 = vmatprep.subr.bf16.mxu0 %v1764
        %1828 = vmatpush1.bf16.msra.mxu0 %v1763
        %1829 = vmatprep.subr.bf16.mxu0 %v1766
        %1830 = vmatpush1.bf16.msra.mxu0 %v1765
        %1831 = vmatprep.mubr.bf16.mxu0 %v1590
        %1832 = vmatmul.mubr.bf16.gmra.mrb[0].mxu0 %v1589
        %v1833 = vpop.f32.mrb[0].mxu0
        %v1834 = vadd.f32 %v1632, %v1833
        %v1835 = vpop.f32.mrb[0].mxu0
        %v1836 = vadd.f32 %v1636, %v1835
        %v1837 = vpop.f32.mrb[0].mxu0
        %v1838 = vadd.f32 %v1632, %v1837
        %v1839 = vpop.f32.mrb[0].mxu0
        %v1840 = vadd.f32 %v1636, %v1839
        %1841 = vmatprep.mubr.bf16.mxu0 %v1592
        %1842 = vmatmul.mubr.bf16.gmra.mrb[0].mxu0 %v1591
        %v1843 = vpop.f32.mrb[0].mxu0
        %v1844 = vadd.f32 %v1632, %v1843
        %v1845 = vpop.f32.mrb[0].mxu0
        %v1846 = vadd.f32 %v1636, %v1845
        %v1847 = vpop.f32.mrb[0].mxu0
        %v1848 = vadd.f32 %v1632, %v1847
        %v1849 = vpop.f32.mrb[0].mxu0
        %v1850 = vadd.f32 %v1636, %v1849
        %1851 = vdwg.mxu0
        %v1852 = vtanh.pop %v1834
        %v1853 = vtanh.pop %v1836
        %v1854 = vtanh.pop %v1838
        %v1855 = vtanh.pop %v1840
        %v1856 = vtanh.pop %v1844
        %v1857 = vtanh.pop %v1846
        %v1858 = vtanh.pop %v1848
        %v1859 = vtanh.pop %v1850
        %v1860 = vpack.c.bf16 %v1854, %v1852
        %v1861 = vpack.c.bf16 %v1855, %v1853
        %v1862 = vpack.c.bf16 %v1858, %v1856
        %v1863 = vpack.c.bf16 %v1859, %v1857
        %s1864 = scalar_lea.vmem [#allocation5], 512
        %v1865 = vld [vmem:[%s1864] sm:$0xff]
        %v1866 = vld [vmem:[%s1864 + $0x8] sm:$0xff]
        %v1867 = vld [vmem:[%s1864 + $0x10] sm:$0xff]
        %v1868 = vld [vmem:[%s1864 + $0x18] sm:$0xff]
        %v1869 = vld [vmem:[%s1864 + $0x20] sm:$0xff]
        %v1870 = vld [vmem:[%s1864 + $0x28] sm:$0xff]
        %v1871 = vld [vmem:[%s1864 + $0x30] sm:$0xff]
        %v1872 = vld [vmem:[%s1864 + $0x38] sm:$0xff]
        %v1873 = vld [vmem:[%s1864 + $0x40] sm:$0xff]
        %v1874 = vld [vmem:[%s1864 + $0x48] sm:$0xff]
        %v1875 = vld [vmem:[%s1864 + $0x50] sm:$0xff]
        %v1876 = vld [vmem:[%s1864 + $0x58] sm:$0xff]
        %v1877 = vld [vmem:[%s1864 + $0x60] sm:$0xff]
        %v1878 = vld [vmem:[%s1864 + $0x68] sm:$0xff]
        %v1879 = vld [vmem:[%s1864 + $0x70] sm:$0xff]
        %v1880 = vld [vmem:[%s1864 + $0x78] sm:$0xff]
        %v1881 = vld [vmem:[%s1864 + $0x80] sm:$0xff]
        %v1882 = vld [vmem:[%s1864 + $0x88] sm:$0xff]
        %v1883 = vld [vmem:[%s1864 + $0x90] sm:$0xff]
        %v1884 = vld [vmem:[%s1864 + $0x98] sm:$0xff]
        %v1885 = vld [vmem:[%s1864 + $0xa0] sm:$0xff]
        %v1886 = vld [vmem:[%s1864 + $0xa8] sm:$0xff]
        %v1887 = vld [vmem:[%s1864 + $0xb0] sm:$0xff]
        %v1888 = vld [vmem:[%s1864 + $0xb8] sm:$0xff]
        %v1889 = vld [vmem:[%s1864 + $0xc0] sm:$0xff]
        %v1890 = vld [vmem:[%s1864 + $0xc8] sm:$0xff]
        %v1891 = vld [vmem:[%s1864 + $0xd0] sm:$0xff]
        %v1892 = vld [vmem:[%s1864 + $0xd8] sm:$0xff]
        %v1893 = vld [vmem:[%s1864 + $0xe0] sm:$0xff]
        %v1894 = vld [vmem:[%s1864 + $0xe8] sm:$0xff]
        %v1895 = vld [vmem:[%s1864 + $0xf0] sm:$0xff]
        %v1896 = vld [vmem:[%s1864 + $0xf8] sm:$0xff]
        %s1897 = scalar_lea.vmem %s6, 4
        %v1898 = vld [vmem:[%s1897] sm:$0x3]
        %v1900 = vlaneseq
        %v1901 = vshrl.u32 %v1900, 7
        %v1902 = vsub.s32 0, %v1901
        %v1903 = vrot.slane %v1898, %v1902
        %v1904 = vlaneseq
        %v1905 = vshrl.u32 %v1904, 7
        %v1906 = vsub.s32 1, %v1905
        %v1907 = vrot.slane %v1898, %v1906
        %v1942 = vunpack.c.l.b16 %v1865
        %v1943 = vunpack.c.h.b16 %v1865
        %v1944 = vunpack.c.l.b16 %v1866
        %v1945 = vunpack.c.h.b16 %v1866
        %v1946 = vunpack.c.l.b16 %v1867
        %v1947 = vunpack.c.h.b16 %v1867
        %v1948 = vunpack.c.l.b16 %v1868
        %v1949 = vunpack.c.h.b16 %v1868
        %v1950 = vunpack.c.l.b16 %v1869
        %v1951 = vunpack.c.h.b16 %v1869
        %v1952 = vunpack.c.l.b16 %v1870
        %v1953 = vunpack.c.h.b16 %v1870
        %v1954 = vunpack.c.l.b16 %v1871
        %v1955 = vunpack.c.h.b16 %v1871
        %v1956 = vunpack.c.l.b16 %v1872
        %v1957 = vunpack.c.h.b16 %v1872
        %v1958 = vunpack.c.l.b16 %v1873
        %v1959 = vunpack.c.h.b16 %v1873
        %v1960 = vunpack.c.l.b16 %v1874
        %v1961 = vunpack.c.h.b16 %v1874
        %v1962 = vunpack.c.l.b16 %v1875
        %v1963 = vunpack.c.h.b16 %v1875
        %v1964 = vunpack.c.l.b16 %v1876
        %v1965 = vunpack.c.h.b16 %v1876
        %v1966 = vunpack.c.l.b16 %v1877
        %v1967 = vunpack.c.h.b16 %v1877
        %v1968 = vunpack.c.l.b16 %v1878
        %v1969 = vunpack.c.h.b16 %v1878
        %v1970 = vunpack.c.l.b16 %v1879
        %v1971 = vunpack.c.h.b16 %v1879
        %v1972 = vunpack.c.l.b16 %v1880
        %v1973 = vunpack.c.h.b16 %v1880
        %v1974 = vunpack.c.l.b16 %v1881
        %v1975 = vunpack.c.h.b16 %v1881
        %v1976 = vunpack.c.l.b16 %v1882
        %v1977 = vunpack.c.h.b16 %v1882
        %v1978 = vunpack.c.l.b16 %v1883
        %v1979 = vunpack.c.h.b16 %v1883
        %v1980 = vunpack.c.l.b16 %v1884
        %v1981 = vunpack.c.h.b16 %v1884
        %v1982 = vunpack.c.l.b16 %v1885
        %v1983 = vunpack.c.h.b16 %v1885
        %v1984 = vunpack.c.l.b16 %v1886
        %v1985 = vunpack.c.h.b16 %v1886
        %v1986 = vunpack.c.l.b16 %v1887
        %v1987 = vunpack.c.h.b16 %v1887
        %v1988 = vunpack.c.l.b16 %v1888
        %v1989 = vunpack.c.h.b16 %v1888
        %v1990 = vunpack.c.l.b16 %v1889
        %v1991 = vunpack.c.h.b16 %v1889
        %v1992 = vunpack.c.l.b16 %v1890
        %v1993 = vunpack.c.h.b16 %v1890
        %v1994 = vunpack.c.l.b16 %v1891
        %v1995 = vunpack.c.h.b16 %v1891
        %v1996 = vunpack.c.l.b16 %v1892
        %v1997 = vunpack.c.h.b16 %v1892
        %v1998 = vunpack.c.l.b16 %v1893
        %v1999 = vunpack.c.h.b16 %v1893
        %v2000 = vunpack.c.l.b16 %v1894
        %v2001 = vunpack.c.h.b16 %v1894
        %v2002 = vunpack.c.l.b16 %v1895
        %v2003 = vunpack.c.h.b16 %v1895
        %v2004 = vunpack.c.l.b16 %v1896
        %v2005 = vunpack.c.h.b16 %v1896
        %v2006 = vpack.c.b16 %v1944, %v1942
        %v2007 = vpack.c.b16 %v1945, %v1943
        %v2008 = vpack.c.b16 %v1948, %v1946
        %v2009 = vpack.c.b16 %v1949, %v1947
        %v2010 = vpack.c.b16 %v1952, %v1950
        %v2011 = vpack.c.b16 %v1953, %v1951
        %v2012 = vpack.c.b16 %v1956, %v1954
        %v2013 = vpack.c.b16 %v1957, %v1955
        %v2014 = vpack.c.b16 %v1960, %v1958
        %v2015 = vpack.c.b16 %v1961, %v1959
        %v2016 = vpack.c.b16 %v1964, %v1962
        %v2017 = vpack.c.b16 %v1965, %v1963
        %v2018 = vpack.c.b16 %v1968, %v1966
        %v2019 = vpack.c.b16 %v1969, %v1967
        %v2020 = vpack.c.b16 %v1972, %v1970
        %v2021 = vpack.c.b16 %v1973, %v1971
        %v2022 = vpack.c.b16 %v1976, %v1974
        %v2023 = vpack.c.b16 %v1977, %v1975
        %v2024 = vpack.c.b16 %v1980, %v1978
        %v2025 = vpack.c.b16 %v1981, %v1979
        %v2026 = vpack.c.b16 %v1984, %v1982
        %v2027 = vpack.c.b16 %v1985, %v1983
        %v2028 = vpack.c.b16 %v1988, %v1986
        %v2029 = vpack.c.b16 %v1989, %v1987
        %v2030 = vpack.c.b16 %v1992, %v1990
        %v2031 = vpack.c.b16 %v1993, %v1991
        %v2032 = vpack.c.b16 %v1996, %v1994
        %v2033 = vpack.c.b16 %v1997, %v1995
        %v2034 = vpack.c.b16 %v2000, %v1998
        %v2035 = vpack.c.b16 %v2001, %v1999
        %v2036 = vpack.c.b16 %v2004, %v2002
        %v2037 = vpack.c.b16 %v2005, %v2003
        %2070 = vmatprep.subr.bf16.mxu0 %v2007
        %2071 = vmatpush1.bf16.msra.mxu0 %v2006
        %2072 = vmatprep.subr.bf16.mxu0 %v2009
        %2073 = vmatpush1.bf16.msra.mxu0 %v2008
        %2074 = vmatprep.subr.bf16.mxu0 %v2011
        %2075 = vmatpush1.bf16.msra.mxu0 %v2010
        %2076 = vmatprep.subr.bf16.mxu0 %v2013
        %2077 = vmatpush1.bf16.msra.mxu0 %v2012
        %2078 = vmatprep.subr.bf16.mxu0 %v2015
        %2079 = vmatpush1.bf16.msra.mxu0 %v2014
        %2080 = vmatprep.subr.bf16.mxu0 %v2017
        %2081 = vmatpush1.bf16.msra.mxu0 %v2016
        %2082 = vmatprep.subr.bf16.mxu0 %v2019
        %2083 = vmatpush1.bf16.msra.mxu0 %v2018
        %2084 = vmatprep.subr.bf16.mxu0 %v2021
        %2085 = vmatpush1.bf16.msra.mxu0 %v2020
        %2086 = vmatprep.subr.bf16.mxu0 %v2023
        %2087 = vmatpush1.bf16.msra.mxu0 %v2022
        %2088 = vmatprep.subr.bf16.mxu0 %v2025
        %2089 = vmatpush1.bf16.msra.mxu0 %v2024
        %2090 = vmatprep.subr.bf16.mxu0 %v2027
        %2091 = vmatpush1.bf16.msra.mxu0 %v2026
        %2092 = vmatprep.subr.bf16.mxu0 %v2029
        %2093 = vmatpush1.bf16.msra.mxu0 %v2028
        %2094 = vmatprep.subr.bf16.mxu0 %v2031
        %2095 = vmatpush1.bf16.msra.mxu0 %v2030
        %2096 = vmatprep.subr.bf16.mxu0 %v2033
        %2097 = vmatpush1.bf16.msra.mxu0 %v2032
        %2098 = vmatprep.subr.bf16.mxu0 %v2035
        %2099 = vmatpush1.bf16.msra.mxu0 %v2034
        %2100 = vmatprep.subr.bf16.mxu0 %v2037
        %2101 = vmatpush1.bf16.msra.mxu0 %v2036
        %2102 = vmatprep.mubr.bf16.mxu0 %v1861
        %2103 = vmatmul.mubr.bf16.gmra.mrb[0].mxu0 %v1860
        %v2104 = vpop.f32.mrb[0].mxu0
        %v2105 = vadd.f32 %v1903, %v2104
        %v2106 = vpop.f32.mrb[0].mxu0
        %v2107 = vadd.f32 %v1907, %v2106
        %v2108 = vpop.f32.mrb[0].mxu0
        %v2109 = vadd.f32 %v1903, %v2108
        %v2110 = vpop.f32.mrb[0].mxu0
        %v2111 = vadd.f32 %v1907, %v2110
        %2112 = vmatprep.mubr.bf16.mxu0 %v1863
        %2113 = vmatmul.mubr.bf16.gmra.mrb[0].mxu0 %v1862
        %v2114 = vpop.f32.mrb[0].mxu0
        %v2115 = vadd.f32 %v1903, %v2114
        %v2116 = vpop.f32.mrb[0].mxu0
        %v2117 = vadd.f32 %v1907, %v2116
        %v2118 = vpop.f32.mrb[0].mxu0
        %v2119 = vadd.f32 %v1903, %v2118
        %v2120 = vpop.f32.mrb[0].mxu0
        %v2121 = vadd.f32 %v1907, %v2120
        %2122 = vdwg.mxu0
        %v2123 = vadd.f32 %v2105, %v1581
        %v2124 = vadd.f32 %v2107, %v1582
        %v2125 = vadd.f32 %v2109, %v1583
        %v2126 = vadd.f32 %v2111, %v1584
        %v2127 = vadd.f32 %v2115, %v1585
        %v2128 = vadd.f32 %v2117, %v1586
        %v2129 = vadd.f32 %v2119, %v1587
        %v2130 = vadd.f32 %v2121, %v1588
        %v2131 = vpack.c.bf16 %v2125, %v2123
        %v2132 = vpack.c.bf16 %v2126, %v2124
        %v2133 = vpack.c.bf16 %v2129, %v2127
        %v2134 = vpack.c.bf16 %v2130, %v2128
        %v2135 = vld [vmem:[#allocation7] sm:$0xf]
        %v2136 = vld [vmem:[#allocation7 + $0x4] sm:$0xf]
        %v2137 = vld [vmem:[#allocation7 + $0x8] sm:$0xf]
        %v2138 = vld [vmem:[#allocation7 + $0xc] sm:$0xf]
        %v2139 = vld [vmem:[#allocation7 + $0x10] sm:$0xf]
        %v2140 = vld [vmem:[#allocation7 + $0x14] sm:$0xf]
        %v2141 = vld [vmem:[#allocation7 + $0x18] sm:$0xf]
        %v2142 = vld [vmem:[#allocation7 + $0x1c] sm:$0xf]
        %v2143 = vld [vmem:[#allocation7 + $0x20] sm:$0xf]
        %v2144 = vld [vmem:[#allocation7 + $0x24] sm:$0xf]
        %v2145 = vld [vmem:[#allocation7 + $0x28] sm:$0xf]
        %v2146 = vld [vmem:[#allocation7 + $0x2c] sm:$0xf]
        %v2147 = vld [vmem:[#allocation7 + $0x30] sm:$0xf]
        %v2148 = vld [vmem:[#allocation7 + $0x34] sm:$0xf]
        %v2149 = vld [vmem:[#allocation7 + $0x38] sm:$0xf]
        %v2150 = vld [vmem:[#allocation7 + $0x3c] sm:$0xf]
        %v2151 = vld [vmem:[#allocation7 + $0x40] sm:$0xf]
        %v2152 = vld [vmem:[#allocation7 + $0x44] sm:$0xf]
        %v2153 = vld [vmem:[#allocation7 + $0x48] sm:$0xf]
        %v2154 = vld [vmem:[#allocation7 + $0x4c] sm:$0xf]
        %v2155 = vld [vmem:[#allocation7 + $0x50] sm:$0xf]
        %v2156 = vld [vmem:[#allocation7 + $0x54] sm:$0xf]
        %v2157 = vld [vmem:[#allocation7 + $0x58] sm:$0xf]
        %v2158 = vld [vmem:[#allocation7 + $0x5c] sm:$0xf]
        %v2159 = vld [vmem:[#allocation7 + $0x60] sm:$0xf]
        %v2160 = vld [vmem:[#allocation7 + $0x64] sm:$0xf]
        %v2161 = vld [vmem:[#allocation7 + $0x68] sm:$0xf]
        %v2162 = vld [vmem:[#allocation7 + $0x6c] sm:$0xf]
        %v2163 = vld [vmem:[#allocation7 + $0x70] sm:$0xf]
        %v2164 = vld [vmem:[#allocation7 + $0x74] sm:$0xf]
        %v2165 = vld [vmem:[#allocation7 + $0x78] sm:$0xf]
        %v2166 = vld [vmem:[#allocation7 + $0x7c] sm:$0xf]
        %v2167 = vld [vmem:[%s8] sm:$0x1]
        %v2169 = vlaneseq
        %v2170 = vshrl.u32 %v2169, 7
        %v2171 = vsub.s32 0, %v2170
        %v2172 = vrot.slane %v2167, %v2171
        %v2206 = vunpack.c.l.b16 %v2135
        %v2207 = vunpack.c.l.b16 %v2136
        %v2208 = vunpack.c.l.b16 %v2137
        %v2209 = vunpack.c.l.b16 %v2138
        %v2210 = vunpack.c.l.b16 %v2139
        %v2211 = vunpack.c.l.b16 %v2140
        %v2212 = vunpack.c.l.b16 %v2141
        %v2213 = vunpack.c.l.b16 %v2142
        %v2214 = vunpack.c.l.b16 %v2143
        %v2215 = vunpack.c.l.b16 %v2144
        %v2216 = vunpack.c.l.b16 %v2145
        %v2217 = vunpack.c.l.b16 %v2146
        %v2218 = vunpack.c.l.b16 %v2147
        %v2219 = vunpack.c.l.b16 %v2148
        %v2220 = vunpack.c.l.b16 %v2149
        %v2221 = vunpack.c.l.b16 %v2150
        %v2222 = vunpack.c.l.b16 %v2151
        %v2223 = vunpack.c.l.b16 %v2152
        %v2224 = vunpack.c.l.b16 %v2153
        %v2225 = vunpack.c.l.b16 %v2154
        %v2226 = vunpack.c.l.b16 %v2155
        %v2227 = vunpack.c.l.b16 %v2156
        %v2228 = vunpack.c.l.b16 %v2157
        %v2229 = vunpack.c.l.b16 %v2158
        %v2230 = vunpack.c.l.b16 %v2159
        %v2231 = vunpack.c.l.b16 %v2160
        %v2232 = vunpack.c.l.b16 %v2161
        %v2233 = vunpack.c.l.b16 %v2162
        %v2234 = vunpack.c.l.b16 %v2163
        %v2235 = vunpack.c.l.b16 %v2164
        %v2236 = vunpack.c.l.b16 %v2165
        %v2237 = vunpack.c.l.b16 %v2166
        %v2238 = vpack.c.b16 %v2207, %v2206
        %v2239 = vpack.c.b16 %v2209, %v2208
        %v2240 = vpack.c.b16 %v2211, %v2210
        %v2241 = vpack.c.b16 %v2213, %v2212
        %v2242 = vpack.c.b16 %v2215, %v2214
        %v2243 = vpack.c.b16 %v2217, %v2216
        %v2244 = vpack.c.b16 %v2219, %v2218
        %v2245 = vpack.c.b16 %v2221, %v2220
        %v2246 = vpack.c.b16 %v2223, %v2222
        %v2247 = vpack.c.b16 %v2225, %v2224
        %v2248 = vpack.c.b16 %v2227, %v2226
        %v2249 = vpack.c.b16 %v2229, %v2228
        %v2250 = vpack.c.b16 %v2231, %v2230
        %v2251 = vpack.c.b16 %v2233, %v2232
        %v2252 = vpack.c.b16 %v2235, %v2234
        %v2253 = vpack.c.b16 %v2237, %v2236
        %2270 = vmatprep.subr.bf16.mxu0 0
        %2271 = vmatpush1.bf16.msra.mxu0 %v2238
        %2272 = vmatprep.subr.bf16.mxu0 0
        %2273 = vmatpush1.bf16.msra.mxu0 %v2239
        %2274 = vmatprep.subr.bf16.mxu0 0
        %2275 = vmatpush1.bf16.msra.mxu0 %v2240
        %2276 = vmatprep.subr.bf16.mxu0 0
        %2277 = vmatpush1.bf16.msra.mxu0 %v2241
        %2278 = vmatprep.subr.bf16.mxu0 0
        %2279 = vmatpush1.bf16.msra.mxu0 %v2242
        %2280 = vmatprep.subr.bf16.mxu0 0
        %2281 = vmatpush1.bf16.msra.mxu0 %v2243
        %2282 = vmatprep.subr.bf16.mxu0 0
        %2283 = vmatpush1.bf16.msra.mxu0 %v2244
        %2284 = vmatprep.subr.bf16.mxu0 0
        %2285 = vmatpush1.bf16.msra.mxu0 %v2245
        %2286 = vmatprep.subr.bf16.mxu0 0
        %2287 = vmatpush1.bf16.msra.mxu0 %v2246
        %2288 = vmatprep.subr.bf16.mxu0 0
        %2289 = vmatpush1.bf16.msra.mxu0 %v2247
        %2290 = vmatprep.subr.bf16.mxu0 0
        %2291 = vmatpush1.bf16.msra.mxu0 %v2248
        %2292 = vmatprep.subr.bf16.mxu0 0
        %2293 = vmatpush1.bf16.msra.mxu0 %v2249
        %2294 = vmatprep.subr.bf16.mxu0 0
        %2295 = vmatpush1.bf16.msra.mxu0 %v2250
        %2296 = vmatprep.subr.bf16.mxu0 0
        %2297 = vmatpush1.bf16.msra.mxu0 %v2251
        %2298 = vmatprep.subr.bf16.mxu0 0
        %2299 = vmatpush1.bf16.msra.mxu0 %v2252
        %2300 = vmatprep.subr.bf16.mxu0 0
        %2301 = vmatpush1.bf16.msra.mxu0 %v2253
        %2302 = vmatprep.mubr.bf16.mxu0 %v2132
        %2303 = vmatmul.mubr.bf16.gmra.mrb[0].mxu0 %v2131
        %v2304 = vpop.f32.mrb[0].mxu0
        %v2305 = vadd.f32 %v2172, %v2304
        %v2306 = vpop.f32.mrb[0].mxu0
        %v2307 = vpop.f32.mrb[0].mxu0
        %v2308 = vadd.f32 %v2172, %v2307
        %v2309 = vpop.f32.mrb[0].mxu0
        %2310 = vmatprep.mubr.bf16.mxu0 %v2134
        %2311 = vmatmul.mubr.bf16.gmra.mrb[0].mxu0 %v2133
        %v2312 = vpop.f32.mrb[0].mxu0
        %v2313 = vadd.f32 %v2172, %v2312
        %v2314 = vpop.f32.mrb[0].mxu0
        %v2315 = vpop.f32.mrb[0].mxu0
        %v2316 = vadd.f32 %v2172, %v2315
        %v2317 = vpop.f32.mrb[0].mxu0
        %2318 = vdwg.mxu0
        %2319 = vst [vmem:[%s370] sm:$0xff] %v2305
        %2320 = vst [vmem:[%s370 + $0x8] sm:$0xff] %v2308
        %2321 = vst [vmem:[%s370 + $0x10] sm:$0xff] %v2313
        %2322 = vst [vmem:[%s370 + $0x18] sm:$0xff] %v2316
        %s2323 = sand.u32 %s227, 1
        %s2324 = scalar_lea.sflag [#allocation4], %s2323
        %s2325 = sand.u32 %s227, 1
        %s2326 = smul.addr %s2325, 32
        %s2327 = scalar_lea.vmem [#allocation8], %s2326
        // Predicated region
        $region69: #{tpu_custom_call.1} parent=55 // pred_check
          %p2328 = pneg %p237
        $region70: #{tpu_custom_call.1} parent=55 // pred_check_branch
          %2330 = sbr.rel (%p2328) target = $region72
        $region71: #{tpu_custom_call.1} parent=55 // pred_region
          %s2331 = smul.u32 4, %s25
          %s2333 = ssub.s32 512, 512
          %2334 = vsyncadd %s2324, %s2333
          %s2335 = smul.addr %s2331, 128
          %s2336 = scalar_lea.hbm %s9, %s2335
          %s2337 = sshll.u32 %s2327, 4
          %s2338 = int_to_ptr.vmem [resolvable:$true] %s2337
          %2343 = dma.vmem_to_hbm [thread:$0]  %s2338, 512, %s2336, %s2324, 128, 128, 8
        $region72: #{tpu_custom_call.1} parent=55 // pred_fallthru
          _
      $region56: #{tpu_custom_call.1} parent=5 // pred_fallthru
        _
      %p2344 = scmp.le.s32.totalorder 2, %s20
      // Predicated region
      $region73: #{tpu_custom_call.1} parent=5 // pred_check
        %p2345 = pneg %p2344
      $region74: #{tpu_custom_call.1} parent=5 // pred_check_branch
        %2347 = sbr.rel (%p2345) target = $region76
      $region75: #{tpu_custom_call.1} parent=5 // pred_region
        %s2348 = ssub.s32 %s20, 2
        // Predicated region
        $region77: #{tpu_custom_call.1} parent=75 // pred_check
          %p2349 = pneg %p243
        $region78: #{tpu_custom_call.1} parent=75 // pred_check_branch
          %2351 = sbr.rel (%p2349) target = $region80
        $region79: #{tpu_custom_call.1} parent=75 // pred_region
          %s2352 = sand.u32 %s228, 1
          %s2353 = scalar_lea.sflag [#allocation4], %s2352
          %s2354 = sand.u32 %s228, 1
          %s2355 = smul.addr %s2354, 32
          %s2356 = scalar_lea.vmem [#allocation8], %s2355
          %2357 = dma.done %s2353, 512
        $region80: #{tpu_custom_call.1} parent=75 // pred_fallthru
          _
      $region76: #{tpu_custom_call.1} parent=5 // pred_fallthru
        _
    $region6: #{tpu_custom_call.1} parent=1 // loop_footer
      %s24 = sadd.s32 1, %s20
    $region7: #{tpu_custom_call.1} parent=1 // loop_footer_branch
      %19 = sbr.rel target = $region3
    $region8: #{tpu_custom_call.1} parent=1 // loop_exit
      _
    %2358 = vsyncpa [#allocation3], 1
    %s2359 = scalar_lea.sflag [#allocation3], 1
    %2360 = vsyncpa %s2359, 1
    %2361 = vsyncpa [#allocation6], 1
    %2362 = vsyncpa [#allocation4], 1
    %s2363 = scalar_lea.sflag [#allocation4], 1
    %2364 = vsyncpa %s2363, 1

</llo_original>
